<compile_context>
chip_gen: v7x
topology: tpu7x:2x2x1
jax: 0.10.0
libtpu: 0.0.40
codegen_flags: <defaults>
</compile_context>

<pallas_src>
import jax
import jax.numpy as jnp
from jax.experimental import pallas as pl
from jax.experimental.pallas import tpu as pltpu  # noqa: F401  (TPU backend)

EPS = 1e-5
LANE = 128          # padded lane width for the narrow layers
NARROW = 20         # true hidden width of L2..L4
HID1 = 1024         # width of L1
NEG = -1e30         # bias padding -> padded logit columns vanish in softmax


def _bn_relu(h, gamma, beta):
    """BatchNorm1d (training mode, batch stats) + ReLU, all f32.

    Variance as E[x^2] - E[x]^2 saves one full VPU pass over h compared to
    E[(x-mean)^2]; clamp at 0 against cancellation.  Zero-padded columns stay
    exactly zero (mean = var = 0, gamma = beta = 0)."""
    mean = jnp.mean(h, axis=0, keepdims=True)
    mean_sq = jnp.mean(h * h, axis=0, keepdims=True)
    var = jnp.maximum(mean_sq - mean * mean, 0.0)
    h_hat = (h - mean) * jax.lax.rsqrt(var + EPS)
    return jnp.maximum(h_hat * gamma + beta, 0.0)


def mlp_kernel(x_ref, w1_ref, gb1_ref, w2_ref, w345_ref, gbb_ref,
               h1_ref, outs_ref):
    # gb1_ref: (2, 1024)  rows = [gamma1, beta1]
    # w345_ref: (3, 128, 128)  = [w3, w4, w5] (lane-padded)
    # gbb_ref: (7, 128)  rows = [g2, b2, g3, b3, g4, b4, bias5(padded -1e30)]
    # outs_ref: (5, B, 128) slab = [h2, h3, h4, logits, softmax]
    x = x_ref[...]
    gb1 = gb1_ref[...]
    gbb = gbb_ref[...]

    # L1 -> bn1 -> relu                       (1024-wide, already lane-dense)
    h1 = jnp.dot(x, w1_ref[...], preferred_element_type=jnp.float32)
    h1 = _bn_relu(h1, gb1[0:1, :], gb1[1:2, :])
    h1_ref[...] = h1

    # L2 -> bn2 -> relu                       (padded 20 -> 128)
    h2 = jnp.dot(h1, w2_ref[...], preferred_element_type=jnp.float32)
    h2 = _bn_relu(h2, gbb[0:1, :], gbb[1:2, :])
    outs_ref[0] = h2

    # L3 -> bn3 -> relu
    h3 = jnp.dot(h2, w345_ref[0], preferred_element_type=jnp.float32)
    h3 = _bn_relu(h3, gbb[2:3, :], gbb[3:4, :])
    outs_ref[1] = h3

    # L4 -> bn4 -> relu
    h4 = jnp.dot(h3, w345_ref[1], preferred_element_type=jnp.float32)
    h4 = _bn_relu(h4, gbb[4:5, :], gbb[5:6, :])
    outs_ref[2] = h4

    # L5 (with bias) + softmax over features (dim=1).  Padded bias columns
    # are -1e30, so padded logits underflow to 0 in exp() and never touch the
    # max or the denominator.
    logits = jnp.dot(h4, w345_ref[2], preferred_element_type=jnp.float32)
    logits = logits + gbb[6:7, :]
    outs_ref[3] = logits

    m = jnp.max(logits, axis=1, keepdims=True)
    e = jnp.exp(logits - m)
    denom = jnp.sum(e, axis=1, keepdims=True)
    outs_ref[4] = e * pl.reciprocal(denom, approx=True)


def mlp_forward(x, pp, n_outputs):
    """x: [B, n_inputs] f32, pp: packed/lane-padded params.
    Returns (logits, [h1, h2, h3, h4, softmax]) at the true (unpadded) widths."""
    B = x.shape[0]
    f32 = jnp.float32

    out_shapes = (
        jax.ShapeDtypeStruct((B, HID1), f32),     # h1
        jax.ShapeDtypeStruct((5, B, LANE), f32),  # [h2, h3, h4, logits, probs]
    )

    # No grid: every operand is loaded whole into VMEM (< 1 MiB total).
    h1, outs = pl.pallas_call(
        mlp_kernel,
        out_shape=out_shapes,
    )(x, pp["w1"], pp["gb1"], pp["w2"], pp["w345"], pp["gbb"])

    # Strip the lane padding outside the kernel.
    h2 = outs[0, :, :NARROW]
    h3 = outs[1, :, :NARROW]
    h4 = outs[2, :, :NARROW]
    logits = outs[3, :, :n_outputs]
    probs = outs[4, :, :n_outputs]
    return logits, [h1, h2, h3, h4, probs]


# ---------------------------------------------------------------------------
# Parameter construction
# ---------------------------------------------------------------------------

def _xavier_uniform(key, out_features, in_features):
    """Matches torch.nn.init.xavier_uniform_ on a [out, in] weight; returns
    the transposed [in, out] matrix used by the kernel."""
    bound = (6.0 / (in_features + out_features)) ** 0.5
    w = jax.random.uniform(
        key, (out_features, in_features), jnp.float32, -bound, bound
    )
    return w.T  # [in, out]


def init_params(key, n_inputs, n_outputs):
    """True (unpadded) parameters, matching the PyTorch module."""
    ks = jax.random.split(key, 5)
    ones = lambda d: jnp.ones((1, d), jnp.float32)
    zeros = lambda d: jnp.zeros((1, d), jnp.float32)
    return {
        "w1": _xavier_uniform(ks[0], HID1, n_inputs),
        "g1": ones(HID1), "b1": zeros(HID1),
        "w2": _xavier_uniform(ks[1], NARROW, HID1),
        "g2": ones(NARROW), "b2": zeros(NARROW),
        "w3": _xavier_uniform(ks[2], NARROW, NARROW),
        "g3": ones(NARROW), "b3": zeros(NARROW),
        "w4": _xavier_uniform(ks[3], NARROW, NARROW),
        "g4": ones(NARROW), "b4": zeros(NARROW),
        "w5": _xavier_uniform(ks[4], n_outputs, NARROW),
        "bias5": zeros(n_outputs),
    }


def _pad2(a, rows, cols, fill=0.0):
    return jnp.pad(
        a, ((0, rows - a.shape[0]), (0, cols - a.shape[1])),
        constant_values=fill,
    )


def pack_params(p):
    """Zero-pad the narrow feature dims to 128 lanes and pack the small
    parameter tensors into a few buffers (done once, outside the kernel).

    Zero weight/gamma/beta padding keeps padded activation columns exactly 0;
    bias5 padding of -1e30 makes padded logit columns vanish in the softmax."""
    gb1 = jnp.concatenate([p["g1"], p["b1"]], axis=0)            # (2, 1024)
    w2 = _pad2(p["w2"], HID1, LANE)                              # (1024, 128)
    w345 = jnp.stack([
        _pad2(p["w3"], LANE, LANE),
        _pad2(p["w4"], LANE, LANE),
        _pad2(p["w5"], LANE, LANE),
    ], axis=0)                                                   # (3, 128, 128)
    gbb = jnp.concatenate([
        _pad2(p["g2"], 1, LANE), _pad2(p["b2"], 1, LANE),
        _pad2(p["g3"], 1, LANE), _pad2(p["b3"], 1, LANE),
        _pad2(p["g4"], 1, LANE), _pad2(p["b4"], 1, LANE),
        _pad2(p["bias5"], 1, LANE, fill=NEG),
    ], axis=0)                                                   # (7, 128)
    return {"w1": p["w1"], "gb1": gb1, "w2": w2, "w345": w345, "gbb": gbb}


# ---------------------------------------------------------------------------
# Pure-JAX reference of the PyTorch forward (training-mode batchnorm)
# ---------------------------------------------------------------------------

def _reference(x, p):
    def bn_relu(h, g, b):
        mu = jnp.mean(h, axis=0, keepdims=True)
        var = jnp.mean((h - mu) ** 2, axis=0, keepdims=True)
        return jnp.maximum((h - mu) / jnp.sqrt(var + EPS) * g + b, 0.0)

    h1 = bn_relu(x @ p["w1"], p["g1"], p["b1"])
    h2 = bn_relu(h1 @ p["w2"], p["g2"], p["b2"])
    h3 = bn_relu(h2 @ p["w3"], p["g3"], p["b3"])
    h4 = bn_relu(h3 @ p["w4"], p["g4"], p["b4"])
    logits = h4 @ p["w5"] + p["bias5"]
    return logits, [h1, h2, h3, h4, jax.nn.softmax(logits, axis=1)]


if __name__ == "__main__":
    n_inputs, n_outputs, batch = 32, 10, 8

    key = jax.random.PRNGKey(0)
    pkey, xkey = jax.random.split(key)
    params = init_params(pkey, n_inputs, n_outputs)
    packed = pack_params(params)

    # Input: the module flattens via x.view(-1, n_inputs); we build it flat.
    x = jax.random.normal(xkey, (batch, n_inputs), jnp.float32)

    logits, hiddens = mlp_forward(x, packed, n_outputs)
    jax.block_until_ready((logits, hiddens))

    # Correctness check against a pure-JAX reference.
    ref_logits, ref_hiddens = _reference(x, params)
    assert logits.shape == ref_logits.shape
    assert jnp.allclose(logits, ref_logits, atol=1e-4, rtol=1e-4)
    for i, (got, ref) in enumerate(zip(hiddens, ref_hiddens)):
        # softmax uses the EUP approx reciprocal -> slightly looser tolerance.
        tol = 2e-3 if i == 4 else 1e-4
        assert got.shape == ref.shape
        assert jnp.allclose(got, ref, atol=tol, rtol=tol)

    print("KERNEL_OK")
</pallas_src>

<mosaic_0001>
module attributes {stable_mosaic.version = 11 : i64} {
  func.func @mlp_kernel(%arg0: memref<8x32xf32, #tpu.memory_space<vmem>>, %arg1: memref<32x1024xf32, #tpu.memory_space<vmem>>, %arg2: memref<2x1024xf32, #tpu.memory_space<vmem>>, %arg3: memref<1024x128xf32, #tpu.memory_space<vmem>>, %arg4: memref<3x128x128xf32, #tpu.memory_space<vmem>>, %arg5: memref<7x128xf32, #tpu.memory_space<vmem>>, %arg6: memref<8x1024xf32, #tpu.memory_space<vmem>>, %arg7: memref<5x8x128xf32, #tpu.memory_space<vmem>>) attributes {dimension_semantics = [], scalar_prefetch = 0 : i64, scratch_operands = 0 : i64, tpu.core_type = #tpu.core_type<tc>} {
    %c0 = arith.constant 0 : index
    %c0_0 = arith.constant 0 : index
    %0 = vector.load %arg0[%c0, %c0_0] : memref<8x32xf32, #tpu.memory_space<vmem>>, vector<8x32xf32>
    %c0_1 = arith.constant 0 : index
    %c0_2 = arith.constant 0 : index
    %1 = vector.load %arg2[%c0_1, %c0_2] : memref<2x1024xf32, #tpu.memory_space<vmem>>, vector<2x1024xf32>
    %c0_3 = arith.constant 0 : index
    %c0_4 = arith.constant 0 : index
    %2 = vector.load %arg5[%c0_3, %c0_4] : memref<7x128xf32, #tpu.memory_space<vmem>>, vector<7x128xf32>
    %c0_5 = arith.constant 0 : index
    %c0_6 = arith.constant 0 : index
    %3 = vector.load %arg1[%c0_5, %c0_6] : memref<32x1024xf32, #tpu.memory_space<vmem>>, vector<32x1024xf32>
    %cst = arith.constant dense<0.000000e+00> : vector<8x1024xf32>
    %4 = tpu.matmul %0, %3, %cst {dimension_numbers = #tpu.dot_dimension_numbers<[1], [0], [0], [1], [0, 0, 1, 1], [], []>} : vector<8x32xf32>, vector<32x1024xf32>, vector<8x1024xf32> -> vector<8x1024xf32>
    %5 = vector.extract_strided_slice %1 {offsets = [0, 0], sizes = [1, 1024], strides = [1, 1]} : vector<2x1024xf32> to vector<1x1024xf32>
    %6 = vector.extract_strided_slice %1 {offsets = [1, 0], sizes = [1, 1024], strides = [1, 1]} : vector<2x1024xf32> to vector<1x1024xf32>
    %cst_7 = arith.constant dense<0.000000e+00> : vector<1024xf32>
    %7 = vector.multi_reduction <add>, %4, %cst_7 [0] : vector<8x1024xf32> to vector<1024xf32>
    %8 = vector.shape_cast %7 : vector<1024xf32> to vector<1x1024xf32>
    %cst_8 = arith.constant 8.000000e+00 : f32
    %9 = vector.broadcast %cst_8 : f32 to vector<1x1024xf32>
    %10 = arith.divf %8, %9 : vector<1x1024xf32>
    %11 = arith.mulf %4, %4 : vector<8x1024xf32>
    %cst_9 = arith.constant dense<0.000000e+00> : vector<1024xf32>
    %12 = vector.multi_reduction <add>, %11, %cst_9 [0] : vector<8x1024xf32> to vector<1024xf32>
    %13 = vector.shape_cast %12 : vector<1024xf32> to vector<1x1024xf32>
    %cst_10 = arith.constant 8.000000e+00 : f32
    %14 = vector.broadcast %cst_10 : f32 to vector<1x1024xf32>
    %15 = arith.divf %13, %14 : vector<1x1024xf32>
    %16 = arith.mulf %10, %10 : vector<1x1024xf32>
    %17 = arith.subf %15, %16 : vector<1x1024xf32>
    %cst_11 = arith.constant 0.000000e+00 : f32
    %18 = vector.broadcast %cst_11 : f32 to vector<1x1024xf32>
    %19 = arith.maximumf %17, %18 : vector<1x1024xf32>
    %20 = vector.broadcast %10 : vector<1x1024xf32> to vector<8x1024xf32>
    %21 = arith.subf %4, %20 : vector<8x1024xf32>
    %cst_12 = arith.constant 9.99999974E-6 : f32
    %22 = vector.broadcast %cst_12 : f32 to vector<1x1024xf32>
    %23 = arith.addf %19, %22 : vector<1x1024xf32>
    %24 = math.rsqrt %23 : vector<1x1024xf32>
    %25 = vector.broadcast %24 : vector<1x1024xf32> to vector<8x1024xf32>
    %26 = arith.mulf %21, %25 : vector<8x1024xf32>
    %27 = vector.broadcast %5 : vector<1x1024xf32> to vector<8x1024xf32>
    %28 = arith.mulf %26, %27 : vector<8x1024xf32>
    %29 = vector.broadcast %6 : vector<1x1024xf32> to vector<8x1024xf32>
    %30 = arith.addf %28, %29 : vector<8x1024xf32>
    %cst_13 = arith.constant 0.000000e+00 : f32
    %31 = vector.broadcast %cst_13 : f32 to vector<8x1024xf32>
    %32 = arith.maximumf %30, %31 : vector<8x1024xf32>
    %c0_14 = arith.constant 0 : index
    %c0_15 = arith.constant 0 : index
    %33 = vector.load %arg6[%c0_14, %c0_15] : memref<8x1024xf32, #tpu.memory_space<vmem>>, vector<8x1024xf32>
    tpu.vector_store %arg6[%c0_14, %c0_15], %32 {strides = array<i32>} : memref<8x1024xf32, #tpu.memory_space<vmem>>, vector<8x1024xf32>,
    %c0_16 = arith.constant 0 : index
    %c0_17 = arith.constant 0 : index
    %34 = vector.load %arg3[%c0_16, %c0_17] : memref<1024x128xf32, #tpu.memory_space<vmem>>, vector<1024x128xf32>
    %cst_18 = arith.constant dense<0.000000e+00> : vector<8x128xf32>
    %35 = tpu.matmul %32, %34, %cst_18 {dimension_numbers = #tpu.dot_dimension_numbers<[1], [0], [0], [1], [0, 0, 1, 1], [], []>} : vector<8x1024xf32>, vector<1024x128xf32>, vector<8x128xf32> -> vector<8x128xf32>
    %36 = vector.extract_strided_slice %2 {offsets = [0, 0], sizes = [1, 128], strides = [1, 1]} : vector<7x128xf32> to vector<1x128xf32>
    %37 = vector.extract_strided_slice %2 {offsets = [1, 0], sizes = [1, 128], strides = [1, 1]} : vector<7x128xf32> to vector<1x128xf32>
    %cst_19 = arith.constant dense<0.000000e+00> : vector<128xf32>
    %38 = vector.multi_reduction <add>, %35, %cst_19 [0] : vector<8x128xf32> to vector<128xf32>
    %39 = vector.shape_cast %38 : vector<128xf32> to vector<1x128xf32>
    %cst_20 = arith.constant 8.000000e+00 : f32
    %40 = vector.broadcast %cst_20 : f32 to vector<1x128xf32>
    %41 = arith.divf %39, %40 : vector<1x128xf32>
    %42 = arith.mulf %35, %35 : vector<8x128xf32>
    %cst_21 = arith.constant dense<0.000000e+00> : vector<128xf32>
    %43 = vector.multi_reduction <add>, %42, %cst_21 [0] : vector<8x128xf32> to vector<128xf32>
    %44 = vector.shape_cast %43 : vector<128xf32> to vector<1x128xf32>
    %cst_22 = arith.constant 8.000000e+00 : f32
    %45 = vector.broadcast %cst_22 : f32 to vector<1x128xf32>
    %46 = arith.divf %44, %45 : vector<1x128xf32>
    %47 = arith.mulf %41, %41 : vector<1x128xf32>
    %48 = arith.subf %46, %47 : vector<1x128xf32>
    %cst_23 = arith.constant 0.000000e+00 : f32
    %49 = vector.broadcast %cst_23 : f32 to vector<1x128xf32>
    %50 = arith.maximumf %48, %49 : vector<1x128xf32>
    %51 = vector.broadcast %41 : vector<1x128xf32> to vector<8x128xf32>
    %52 = arith.subf %35, %51 : vector<8x128xf32>
    %cst_24 = arith.constant 9.99999974E-6 : f32
    %53 = vector.broadcast %cst_24 : f32 to vector<1x128xf32>
    %54 = arith.addf %50, %53 : vector<1x128xf32>
    %55 = math.rsqrt %54 : vector<1x128xf32>
    %56 = vector.broadcast %55 : vector<1x128xf32> to vector<8x128xf32>
    %57 = arith.mulf %52, %56 : vector<8x128xf32>
    %58 = vector.broadcast %36 : vector<1x128xf32> to vector<8x128xf32>
    %59 = arith.mulf %57, %58 : vector<8x128xf32>
    %60 = vector.broadcast %37 : vector<1x128xf32> to vector<8x128xf32>
    %61 = arith.addf %59, %60 : vector<8x128xf32>
    %cst_25 = arith.constant 0.000000e+00 : f32
    %62 = vector.broadcast %cst_25 : f32 to vector<8x128xf32>
    %63 = arith.maximumf %61, %62 : vector<8x128xf32>
    %c0_26 = arith.constant 0 : index
    %c0_27 = arith.constant 0 : index
    %c0_28 = arith.constant 0 : index
    %64 = vector.load %arg7[%c0_26, %c0_27, %c0_28] : memref<5x8x128xf32, #tpu.memory_space<vmem>>, vector<1x8x128xf32>
    %65 = vector.shape_cast %64 : vector<1x8x128xf32> to vector<8x128xf32>
    %66 = vector.shape_cast %63 : vector<8x128xf32> to vector<1x8x128xf32>
    tpu.vector_store %arg7[%c0_26, %c0_27, %c0_28], %66 {strides = array<i32>} : memref<5x8x128xf32, #tpu.memory_space<vmem>>, vector<1x8x128xf32>,
    %c0_29 = arith.constant 0 : index
    %c0_30 = arith.constant 0 : index
    %c0_31 = arith.constant 0 : index
    %67 = vector.load %arg4[%c0_29, %c0_30, %c0_31] : memref<3x128x128xf32, #tpu.memory_space<vmem>>, vector<1x128x128xf32>
    %68 = vector.shape_cast %67 : vector<1x128x128xf32> to vector<128x128xf32>
    %cst_32 = arith.constant dense<0.000000e+00> : vector<8x128xf32>
    %69 = tpu.matmul %63, %68, %cst_32 {dimension_numbers = #tpu.dot_dimension_numbers<[1], [0], [0], [1], [0, 0, 1, 1], [], []>} : vector<8x128xf32>, vector<128x128xf32>, vector<8x128xf32> -> vector<8x128xf32>
    %70 = vector.extract_strided_slice %2 {offsets = [2, 0], sizes = [1, 128], strides = [1, 1]} : vector<7x128xf32> to vector<1x128xf32>
    %71 = vector.extract_strided_slice %2 {offsets = [3, 0], sizes = [1, 128], strides = [1, 1]} : vector<7x128xf32> to vector<1x128xf32>
    %cst_33 = arith.constant dense<0.000000e+00> : vector<128xf32>
    %72 = vector.multi_reduction <add>, %69, %cst_33 [0] : vector<8x128xf32> to vector<128xf32>
    %73 = vector.shape_cast %72 : vector<128xf32> to vector<1x128xf32>
    %cst_34 = arith.constant 8.000000e+00 : f32
    %74 = vector.broadcast %cst_34 : f32 to vector<1x128xf32>
    %75 = arith.divf %73, %74 : vector<1x128xf32>
    %76 = arith.mulf %69, %69 : vector<8x128xf32>
    %cst_35 = arith.constant dense<0.000000e+00> : vector<128xf32>
    %77 = vector.multi_reduction <add>, %76, %cst_35 [0] : vector<8x128xf32> to vector<128xf32>
    %78 = vector.shape_cast %77 : vector<128xf32> to vector<1x128xf32>
    %cst_36 = arith.constant 8.000000e+00 : f32
    %79 = vector.broadcast %cst_36 : f32 to vector<1x128xf32>
    %80 = arith.divf %78, %79 : vector<1x128xf32>
    %81 = arith.mulf %75, %75 : vector<1x128xf32>
    %82 = arith.subf %80, %81 : vector<1x128xf32>
    %cst_37 = arith.constant 0.000000e+00 : f32
    %83 = vector.broadcast %cst_37 : f32 to vector<1x128xf32>
    %84 = arith.maximumf %82, %83 : vector<1x128xf32>
    %85 = vector.broadcast %75 : vector<1x128xf32> to vector<8x128xf32>
    %86 = arith.subf %69, %85 : vector<8x128xf32>
    %cst_38 = arith.constant 9.99999974E-6 : f32
    %87 = vector.broadcast %cst_38 : f32 to vector<1x128xf32>
    %88 = arith.addf %84, %87 : vector<1x128xf32>
    %89 = math.rsqrt %88 : vector<1x128xf32>
    %90 = vector.broadcast %89 : vector<1x128xf32> to vector<8x128xf32>
    %91 = arith.mulf %86, %90 : vector<8x128xf32>
    %92 = vector.broadcast %70 : vector<1x128xf32> to vector<8x128xf32>
    %93 = arith.mulf %91, %92 : vector<8x128xf32>
    %94 = vector.broadcast %71 : vector<1x128xf32> to vector<8x128xf32>
    %95 = arith.addf %93, %94 : vector<8x128xf32>
    %cst_39 = arith.constant 0.000000e+00 : f32
    %96 = vector.broadcast %cst_39 : f32 to vector<8x128xf32>
    %97 = arith.maximumf %95, %96 : vector<8x128xf32>
    %c1 = arith.constant 1 : index
    %c0_40 = arith.constant 0 : index
    %c0_41 = arith.constant 0 : index
    %98 = vector.load %arg7[%c1, %c0_40, %c0_41] : memref<5x8x128xf32, #tpu.memory_space<vmem>>, vector<1x8x128xf32>
    %99 = vector.shape_cast %98 : vector<1x8x128xf32> to vector<8x128xf32>
    %100 = vector.shape_cast %97 : vector<8x128xf32> to vector<1x8x128xf32>
    tpu.vector_store %arg7[%c1, %c0_40, %c0_41], %100 {strides = array<i32>} : memref<5x8x128xf32, #tpu.memory_space<vmem>>, vector<1x8x128xf32>,
    %c1_42 = arith.constant 1 : index
    %c0_43 = arith.constant 0 : index
    %c0_44 = arith.constant 0 : index
    %101 = vector.load %arg4[%c1_42, %c0_43, %c0_44] : memref<3x128x128xf32, #tpu.memory_space<vmem>>, vector<1x128x128xf32>
    %102 = vector.shape_cast %101 : vector<1x128x128xf32> to vector<128x128xf32>
    %cst_45 = arith.constant dense<0.000000e+00> : vector<8x128xf32>
    %103 = tpu.matmul %97, %102, %cst_45 {dimension_numbers = #tpu.dot_dimension_numbers<[1], [0], [0], [1], [0, 0, 1, 1], [], []>} : vector<8x128xf32>, vector<128x128xf32>, vector<8x128xf32> -> vector<8x128xf32>
    %104 = vector.extract_strided_slice %2 {offsets = [4, 0], sizes = [1, 128], strides = [1, 1]} : vector<7x128xf32> to vector<1x128xf32>
    %105 = vector.extract_strided_slice %2 {offsets = [5, 0], sizes = [1, 128], strides = [1, 1]} : vector<7x128xf32> to vector<1x128xf32>
    %cst_46 = arith.constant dense<0.000000e+00> : vector<128xf32>
    %106 = vector.multi_reduction <add>, %103, %cst_46 [0] : vector<8x128xf32> to vector<128xf32>
    %107 = vector.shape_cast %106 : vector<128xf32> to vector<1x128xf32>
    %cst_47 = arith.constant 8.000000e+00 : f32
    %108 = vector.broadcast %cst_47 : f32 to vector<1x128xf32>
    %109 = arith.divf %107, %108 : vector<1x128xf32>
    %110 = arith.mulf %103, %103 : vector<8x128xf32>
    %cst_48 = arith.constant dense<0.000000e+00> : vector<128xf32>
    %111 = vector.multi_reduction <add>, %110, %cst_48 [0] : vector<8x128xf32> to vector<128xf32>
    %112 = vector.shape_cast %111 : vector<128xf32> to vector<1x128xf32>
    %cst_49 = arith.constant 8.000000e+00 : f32
    %113 = vector.broadcast %cst_49 : f32 to vector<1x128xf32>
    %114 = arith.divf %112, %113 : vector<1x128xf32>
    %115 = arith.mulf %109, %109 : vector<1x128xf32>
    %116 = arith.subf %114, %115 : vector<1x128xf32>
    %cst_50 = arith.constant 0.000000e+00 : f32
    %117 = vector.broadcast %cst_50 : f32 to vector<1x128xf32>
    %118 = arith.maximumf %116, %117 : vector<1x128xf32>
    %119 = vector.broadcast %109 : vector<1x128xf32> to vector<8x128xf32>
    %120 = arith.subf %103, %119 : vector<8x128xf32>
    %cst_51 = arith.constant 9.99999974E-6 : f32
    %121 = vector.broadcast %cst_51 : f32 to vector<1x128xf32>
    %122 = arith.addf %118, %121 : vector<1x128xf32>
    %123 = math.rsqrt %122 : vector<1x128xf32>
    %124 = vector.broadcast %123 : vector<1x128xf32> to vector<8x128xf32>
    %125 = arith.mulf %120, %124 : vector<8x128xf32>
    %126 = vector.broadcast %104 : vector<1x128xf32> to vector<8x128xf32>
    %127 = arith.mulf %125, %126 : vector<8x128xf32>
    %128 = vector.broadcast %105 : vector<1x128xf32> to vector<8x128xf32>
    %129 = arith.addf %127, %128 : vector<8x128xf32>
    %cst_52 = arith.constant 0.000000e+00 : f32
    %130 = vector.broadcast %cst_52 : f32 to vector<8x128xf32>
    %131 = arith.maximumf %129, %130 : vector<8x128xf32>
    %c2 = arith.constant 2 : index
    %c0_53 = arith.constant 0 : index
    %c0_54 = arith.constant 0 : index
    %132 = vector.load %arg7[%c2, %c0_53, %c0_54] : memref<5x8x128xf32, #tpu.memory_space<vmem>>, vector<1x8x128xf32>
    %133 = vector.shape_cast %132 : vector<1x8x128xf32> to vector<8x128xf32>
    %134 = vector.shape_cast %131 : vector<8x128xf32> to vector<1x8x128xf32>
    tpu.vector_store %arg7[%c2, %c0_53, %c0_54], %134 {strides = array<i32>} : memref<5x8x128xf32, #tpu.memory_space<vmem>>, vector<1x8x128xf32>,
    %c2_55 = arith.constant 2 : index
    %c0_56 = arith.constant 0 : index
    %c0_57 = arith.constant 0 : index
    %135 = vector.load %arg4[%c2_55, %c0_56, %c0_57] : memref<3x128x128xf32, #tpu.memory_space<vmem>>, vector<1x128x128xf32>
    %136 = vector.shape_cast %135 : vector<1x128x128xf32> to vector<128x128xf32>
    %cst_58 = arith.constant dense<0.000000e+00> : vector<8x128xf32>
    %137 = tpu.matmul %131, %136, %cst_58 {dimension_numbers = #tpu.dot_dimension_numbers<[1], [0], [0], [1], [0, 0, 1, 1], [], []>} : vector<8x128xf32>, vector<128x128xf32>, vector<8x128xf32> -> vector<8x128xf32>
    %138 = vector.extract_strided_slice %2 {offsets = [6, 0], sizes = [1, 128], strides = [1, 1]} : vector<7x128xf32> to vector<1x128xf32>
    %139 = vector.broadcast %138 : vector<1x128xf32> to vector<8x128xf32>
    %140 = arith.addf %137, %139 : vector<8x128xf32>
    %c3 = arith.constant 3 : index
    %c0_59 = arith.constant 0 : index
    %c0_60 = arith.constant 0 : index
    %141 = vector.load %arg7[%c3, %c0_59, %c0_60] : memref<5x8x128xf32, #tpu.memory_space<vmem>>, vector<1x8x128xf32>
    %142 = vector.shape_cast %141 : vector<1x8x128xf32> to vector<8x128xf32>
    %143 = vector.shape_cast %140 : vector<8x128xf32> to vector<1x8x128xf32>
    tpu.vector_store %arg7[%c3, %c0_59, %c0_60], %143 {strides = array<i32>} : memref<5x8x128xf32, #tpu.memory_space<vmem>>, vector<1x8x128xf32>,
    %cst_61 = arith.constant dense<0xFF800000> : vector<8xf32>
    %144 = vector.multi_reduction <maximumf>, %140, %cst_61 [1] : vector<8x128xf32> to vector<8xf32>
    %145 = vector.shape_cast %144 : vector<8xf32> to vector<8x1xf32>
    %146 = vector.broadcast %145 : vector<8x1xf32> to vector<8x128xf32>
    %147 = arith.subf %140, %146 : vector<8x128xf32>
    %148 = math.exp %147 : vector<8x128xf32>
    %cst_62 = arith.constant dense<0.000000e+00> : vector<8xf32>
    %149 = vector.multi_reduction <add>, %148, %cst_62 [1] : vector<8x128xf32> to vector<8xf32>
    %150 = vector.shape_cast %149 : vector<8xf32> to vector<8x1xf32>
    %151 = tpu.reciprocal %150 {approx = true} : vector<8x1xf32> -> vector<8x1xf32>
    %152 = vector.broadcast %151 : vector<8x1xf32> to vector<8x128xf32>
    %153 = arith.mulf %148, %152 : vector<8x128xf32>
    %c4 = arith.constant 4 : index
    %c0_63 = arith.constant 0 : index
    %c0_64 = arith.constant 0 : index
    %154 = vector.load %arg7[%c4, %c0_63, %c0_64] : memref<5x8x128xf32, #tpu.memory_space<vmem>>, vector<1x8x128xf32>
    %155 = vector.shape_cast %154 : vector<1x8x128xf32> to vector<8x128xf32>
    %156 = vector.shape_cast %153 : vector<8x128xf32> to vector<1x8x128xf32>
    tpu.vector_store %arg7[%c4, %c0_63, %c0_64], %156 {strides = array<i32>} : memref<5x8x128xf32, #tpu.memory_space<vmem>>, vector<1x8x128xf32>,
    return
  }
}

</mosaic_0001>

<llo_original>
// kernel: tpu_custom_call.1
$region0: #{tpu_custom_call.1}
  #allocation0 [shape = 'u32[]', space=smem, size = 0x4, offset = 0x4, fixed_abs, tag = 'smem constant byte address 0x4 - core index']
  #allocation1 [shape = 'u32[144,128]{1,0:T(1,128)}', space=vmem, size = 0x12000, scoped, tag = 'internal scratch']
  %s0 = inlined_call_operand.hbm [shape: f32[8,32], index: 0, kind: input, shape index: {}]
  %s1 = inlined_call_operand.hbm [shape: f32[32,1024], index: 1, kind: input, shape index: {}]
  %s2 = inlined_call_operand.hbm [shape: f32[2,1024], index: 2, kind: input, shape index: {}]
  %s3 = inlined_call_operand.hbm [shape: f32[1024,128], index: 3, kind: input, shape index: {}]
  %s4 = inlined_call_operand.hbm [shape: f32[3,128,128], index: 4, kind: input, shape index: {}]
  %s5 = inlined_call_operand.vmem [shape: f32[7,128], index: 5, kind: input, shape index: {}]
  %s6 = inlined_call_operand.hbm [shape: f32[8,1024], index: 6, kind: output, shape index: {0}]
  %s7 = inlined_call_operand.hbm [shape: f32[5,8,128], index: 7, kind: output, shape index: {1}]
  %8 = xla_tuple %s6, %s7
  %s9 = sld [smem:[#allocation0]]
  $region62: #{tpu_custom_call.1} parent=0
    _
  %s11 = ssub.s32 1, %s9
  %s12 = scalar_select 0, %s11, %s9
  $region1: #{tpu_custom_call.1} parent=0
    #allocation2 [shape = 'u8[4096]{0}', space=vmem, size = 0x1000, scoped, tag = 'input window, operand 0, single buffered']
    #allocation3 [shape = 's32[1]{0}', space=sflag, size = 0x4, scoped, tag = 'scoped memory for tpu_custom_call.1']
    #allocation4 [shape = 's32[1]{0}', space=sflag, size = 0x4, scoped, tag = 'scoped memory for tpu_custom_call.1']
    #allocation5 [shape = 'u8[131072]{0}', space=vmem, size = 0x20000, scoped, tag = 'input window, operand 1, single buffered']
    #allocation6 [shape = 's32[1]{0}', space=sflag, size = 0x4, scoped, tag = 'scoped memory for tpu_custom_call.1']
    #allocation7 [shape = 'u8[8192]{0}', space=vmem, size = 0x2000, scoped, tag = 'input window, operand 2, single buffered']
    #allocation8 [shape = 'u8[524288]{0}', space=vmem, size = 0x80000, scoped, tag = 'input window, operand 3, single buffered']
    #allocation9 [shape = 's32[1]{0}', space=sflag, size = 0x4, scoped, tag = 'scoped memory for tpu_custom_call.1']
    #allocation10 [shape = 'u8[196608]{0}', space=vmem, size = 0x30000, scoped, tag = 'input window, operand 4, single buffered']
    #allocation11 [shape = 'u8[32768]{0}', space=vmem, size = 0x8000, scoped, tag = 'output window, operand 0, single buffered']
    #allocation12 [shape = 'u8[20480]{0}', space=vmem, size = 0x5000, scoped, tag = 'output window, operand 1, single buffered']
    #allocation13 [shape = 's32[1]{0}', space=sflag, size = 0x4, scoped, tag = 'scoped memory for tpu_custom_call.1']
    %13 = vsyncpa [#allocation3], 0
    %14 = vsyncpa [#allocation6], 0
    %15 = vsyncpa [#allocation9], 0
    %16 = vsyncpa [#allocation4], 0
    %17 = vsyncpa [#allocation13], 0
    // Predicated region
    $region2: #{tpu_custom_call.1} parent=1 // pred_check
      _
    $region3: #{tpu_custom_call.1} parent=1 // pred_check_branch
      %19 = sbr.rel (0) target = $region5
    $region4: #{tpu_custom_call.1} parent=1 // pred_region
      %s21 = ssub.s32 128, 128
      %22 = vsyncadd [#allocation3], %s21
      %s24 = sshll.u32 [#allocation2], 4
      %s25 = int_to_ptr.vmem [resolvable:$true] %s24
      %27 = dma.hbm_to_vmem [thread:$0]  %s0, 128, %s25, [#allocation3]
    $region5: #{tpu_custom_call.1} parent=1 // pred_fallthru
      _
    // Predicated region
    $region6: #{tpu_custom_call.1} parent=1 // pred_check
      _
    $region7: #{tpu_custom_call.1} parent=1 // pred_check_branch
      %29 = sbr.rel (0) target = $region9
    $region8: #{tpu_custom_call.1} parent=1 // pred_region
      %s31 = ssub.s32 4096, 4096
      %32 = vsyncadd [#allocation6], %s31
      %s33 = sshll.u32 [#allocation5], 4
      %s34 = int_to_ptr.vmem [resolvable:$true] %s33
      %39 = dma.hbm_to_vmem [thread:$0]  %s1, 4096, %s34, [#allocation6], 1024, 1024, 64
    $region9: #{tpu_custom_call.1} parent=1 // pred_fallthru
      _
    // Predicated region
    $region10: #{tpu_custom_call.1} parent=1 // pred_check
      _
    $region11: #{tpu_custom_call.1} parent=1 // pred_check_branch
      %41 = sbr.rel (0) target = $region13
    $region12: #{tpu_custom_call.1} parent=1 // pred_region
      %s43 = ssub.s32 256, 256
      %44 = vsyncadd [#allocation6], %s43
      %s46 = sshll.u32 [#allocation7], 4
      %s47 = int_to_ptr.vmem [resolvable:$true] %s46
      %49 = dma.hbm_to_vmem [thread:$0]  %s2, 256, %s47, [#allocation6]
    $region13: #{tpu_custom_call.1} parent=1 // pred_fallthru
      _
    // Predicated region
    $region14: #{tpu_custom_call.1} parent=1 // pred_check
      _
    $region15: #{tpu_custom_call.1} parent=1 // pred_check_branch
      %51 = sbr.rel (0) target = $region17
    $region16: #{tpu_custom_call.1} parent=1 // pred_region
      %s53 = ssub.s32 16384, 16384
      %54 = vsyncadd [#allocation9], %s53
      %s55 = sshll.u32 [#allocation8], 4
      %s56 = int_to_ptr.vmem [resolvable:$true] %s55
      %61 = dma.hbm_to_vmem [thread:$0]  %s3, 16384, %s56, [#allocation9], 128, 128, 8
    $region17: #{tpu_custom_call.1} parent=1 // pred_fallthru
      _
    // Predicated region
    $region18: #{tpu_custom_call.1} parent=1 // pred_check
      _
    $region19: #{tpu_custom_call.1} parent=1 // pred_check_branch
      %63 = sbr.rel (0) target = $region21
    $region20: #{tpu_custom_call.1} parent=1 // pred_region
      %s65 = ssub.s32 6144, 6144
      %66 = vsyncadd [#allocation9], %s65
      %s67 = sshll.u32 [#allocation10], 4
      %s68 = int_to_ptr.vmem [resolvable:$true] %s67
      %73 = dma.hbm_to_vmem [thread:$0]  %s4, 6144, %s68, [#allocation9], 128, 128, 8
    $region21: #{tpu_custom_call.1} parent=1 // pred_fallthru
      _
    // Predicated region
    $region22: #{tpu_custom_call.1} parent=1 // pred_check
      _
    $region23: #{tpu_custom_call.1} parent=1 // pred_check_branch
      %75 = sbr.rel (0) target = $region25
    $region24: #{tpu_custom_call.1} parent=1 // pred_region
      _
    $region25: #{tpu_custom_call.1} parent=1 // pred_fallthru
      _
    // Predicated region
    $region26: #{tpu_custom_call.1} parent=1 // pred_check
      _
    $region27: #{tpu_custom_call.1} parent=1 // pred_check_branch
      %77 = sbr.rel (0) target = $region29
    $region28: #{tpu_custom_call.1} parent=1 // pred_region
      %78 = dma.done [#allocation3], 128
    $region29: #{tpu_custom_call.1} parent=1 // pred_fallthru
      _
    // Predicated region
    $region30: #{tpu_custom_call.1} parent=1 // pred_check
      _
    $region31: #{tpu_custom_call.1} parent=1 // pred_check_branch
      %80 = sbr.rel (0) target = $region33
    $region32: #{tpu_custom_call.1} parent=1 // pred_region
      %81 = dma.done [#allocation6], 4096
    $region33: #{tpu_custom_call.1} parent=1 // pred_fallthru
      _
    // Predicated region
    $region34: #{tpu_custom_call.1} parent=1 // pred_check
      _
    $region35: #{tpu_custom_call.1} parent=1 // pred_check_branch
      %83 = sbr.rel (0) target = $region37
    $region36: #{tpu_custom_call.1} parent=1 // pred_region
      %84 = dma.done [#allocation6], 256
    $region37: #{tpu_custom_call.1} parent=1 // pred_fallthru
      _
    // Predicated region
    $region38: #{tpu_custom_call.1} parent=1 // pred_check
      _
    $region39: #{tpu_custom_call.1} parent=1 // pred_check_branch
      %86 = sbr.rel (0) target = $region41
    $region40: #{tpu_custom_call.1} parent=1 // pred_region
      %87 = dma.done [#allocation9], 16384
    $region41: #{tpu_custom_call.1} parent=1 // pred_fallthru
      _
    // Predicated region
    $region42: #{tpu_custom_call.1} parent=1 // pred_check
      _
    $region43: #{tpu_custom_call.1} parent=1 // pred_check_branch
      %89 = sbr.rel (0) target = $region45
    $region44: #{tpu_custom_call.1} parent=1 // pred_region
      %90 = dma.done [#allocation9], 6144
    $region45: #{tpu_custom_call.1} parent=1 // pred_fallthru
      _
    %v91 = vld [vmem:[#allocation2] sm:$0xff]
    %v92 = vld [vmem:[#allocation7] sm:$0xff]
    %v93 = vld [vmem:[#allocation7 + $0x8] sm:$0xff]
    %v94 = vld [vmem:[%s5] sm:$0x7f]
    %v95 = vld [vmem:[#allocation5] sm:$0xff]
    %v96 = vld [vmem:[#allocation5 + $0x8] sm:$0xff]
    %v97 = vld [vmem:[#allocation5 + $0x10] sm:$0xff]
    %v98 = vld [vmem:[#allocation5 + $0x18] sm:$0xff]
    %v99 = vld [vmem:[#allocation5 + $0x20] sm:$0xff]
    %v100 = vld [vmem:[#allocation5 + $0x28] sm:$0xff]
    %v101 = vld [vmem:[#allocation5 + $0x30] sm:$0xff]
    %v102 = vld [vmem:[#allocation5 + $0x38] sm:$0xff]
    %v103 = vld [vmem:[#allocation5 + $0x40] sm:$0xff]
    %v104 = vld [vmem:[#allocation5 + $0x48] sm:$0xff]
    %v105 = vld [vmem:[#allocation5 + $0x50] sm:$0xff]
    %v106 = vld [vmem:[#allocation5 + $0x58] sm:$0xff]
    %v107 = vld [vmem:[#allocation5 + $0x60] sm:$0xff]
    %v108 = vld [vmem:[#allocation5 + $0x68] sm:$0xff]
    %v109 = vld [vmem:[#allocation5 + $0x70] sm:$0xff]
    %v110 = vld [vmem:[#allocation5 + $0x78] sm:$0xff]
    %v111 = vld [vmem:[#allocation5 + $0x80] sm:$0xff]
    %v112 = vld [vmem:[#allocation5 + $0x88] sm:$0xff]
    %v113 = vld [vmem:[#allocation5 + $0x90] sm:$0xff]
    %v114 = vld [vmem:[#allocation5 + $0x98] sm:$0xff]
    %v115 = vld [vmem:[#allocation5 + $0xa0] sm:$0xff]
    %v116 = vld [vmem:[#allocation5 + $0xa8] sm:$0xff]
    %v117 = vld [vmem:[#allocation5 + $0xb0] sm:$0xff]
    %v118 = vld [vmem:[#allocation5 + $0xb8] sm:$0xff]
    %v119 = vld [vmem:[#allocation5 + $0xc0] sm:$0xff]
    %v120 = vld [vmem:[#allocation5 + $0xc8] sm:$0xff]
    %v121 = vld [vmem:[#allocation5 + $0xd0] sm:$0xff]
    %v122 = vld [vmem:[#allocation5 + $0xd8] sm:$0xff]
    %v123 = vld [vmem:[#allocation5 + $0xe0] sm:$0xff]
    %v124 = vld [vmem:[#allocation5 + $0xe8] sm:$0xff]
    %v125 = vld [vmem:[#allocation5 + $0xf0] sm:$0xff]
    %v126 = vld [vmem:[#allocation5 + $0xf8] sm:$0xff]
    %vm127 = vcmask 261120
    %v129 = vsel %vm127, %v91, 0
    %131 = vmatprep.subr.mxu0 %v96
    %132 = vmatpush1.msra.mxu0 %v95
    %133 = vmatprep.subr.mxu0 %v104
    %134 = vmatpush1.msra.mxu0 %v103
    %135 = vmatprep.subr.mxu0 %v112
    %136 = vmatpush1.msra.mxu0 %v111
    %137 = vmatprep.subr.mxu0 %v120
    %138 = vmatpush1.msra.mxu0 %v119
    %139 = vmatprep.subr.mxu0 0.0
    %140 = vmatpush1.msra.mxu0 0.0
    %141 = vmatprep.subr.mxu0 0.0
    %142 = vmatpush1.msra.mxu0 0.0
    %143 = vmatprep.subr.mxu0 0.0
    %144 = vmatpush1.msra.mxu0 0.0
    %145 = vmatprep.subr.mxu0 0.0
    %146 = vmatpush1.msra.mxu0 0.0
    %147 = vmatprep.subr.mxu0 0.0
    %148 = vmatpush1.msra.mxu0 0.0
    %149 = vmatprep.subr.mxu0 0.0
    %150 = vmatpush1.msra.mxu0 0.0
    %151 = vmatprep.subr.mxu0 0.0
    %152 = vmatpush1.msra.mxu0 0.0
    %153 = vmatprep.subr.mxu0 0.0
    %154 = vmatpush1.msra.mxu0 0.0
    %155 = vmatprep.subr.mxu0 0.0
    %156 = vmatpush1.msra.mxu0 0.0
    %157 = vmatprep.subr.mxu0 0.0
    %158 = vmatpush1.msra.mxu0 0.0
    %159 = vmatprep.subr.mxu0 0.0
    %160 = vmatpush1.msra.mxu0 0.0
    %161 = vmatprep.subr.mxu0 0.0
    %162 = vmatpush1.msra.mxu0 0.0
    %163 = vmatprep.subr.mxu0 0.0
    %164 = vmatpush1.msra.mxu0 0.0
    %165 = vmatprep.subr.mxu0 0.0
    %166 = vmatpush1.msra.mxu0 0.0
    %167 = vmatprep.subr.mxu0 0.0
    %168 = vmatpush1.msra.mxu0 0.0
    %169 = vmatprep.subr.mxu0 0.0
    %170 = vmatpush1.msra.mxu0 0.0
    %171 = vmatprep.subr.mxu0 0.0
    %172 = vmatpush1.msra.mxu0 0.0
    %173 = vmatprep.subr.mxu0 0.0
    %174 = vmatpush1.msra.mxu0 0.0
    %175 = vmatprep.subr.mxu0 0.0
    %176 = vmatpush1.msra.mxu0 0.0
    %177 = vmatprep.subr.mxu0 0.0
    %178 = vmatpush1.msra.mxu0 0.0
    %179 = vmatprep.subr.mxu0 0.0
    %180 = vmatpush1.msra.mxu0 0.0
    %181 = vmatprep.subr.mxu0 0.0
    %182 = vmatpush1.msra.mxu0 0.0
    %183 = vmatprep.subr.mxu0 0.0
    %184 = vmatpush1.msra.mxu0 0.0
    %185 = vmatprep.subr.mxu0 0.0
    %186 = vmatpush1.msra.mxu0 0.0
    %187 = vmatprep.subr.mxu0 0.0
    %188 = vmatpush1.msra.mxu0 0.0
    %189 = vmatprep.subr.mxu0 0.0
    %190 = vmatpush1.msra.mxu0 0.0
    %191 = vmatprep.subr.mxu0 0.0
    %192 = vmatpush1.msra.mxu0 0.0
    %193 = vmatprep.subr.mxu0 0.0
    %194 = vmatpush1.msra.mxu0 0.0
    %195 = vmatprep.mubr.f32.mxu0 0.0
    %196 = vmatmul.mubr.f32.gmra.mrb[0].mxu0 %v129
    %v197 = vpop.f32.mrb[0].mxu0
    %v198 = vadd.f32 0.0, %v197
    %v199 = vpop.f32.mrb[0].mxu0
    %v200 = vadd.f32 0.0, %v199
    %201 = vdwg.mxu0
    %202 = vmatprep.subr.mxu0 %v98
    %203 = vmatpush1.msra.mxu0 %v97
    %204 = vmatprep.subr.mxu0 %v106
    %205 = vmatpush1.msra.mxu0 %v105
    %206 = vmatprep.subr.mxu0 %v114
    %207 = vmatpush1.msra.mxu0 %v113
    %208 = vmatprep.subr.mxu0 %v122
    %209 = vmatpush1.msra.mxu0 %v121
    %210 = vmatprep.subr.mxu0 0.0
    %211 = vmatpush1.msra.mxu0 0.0
    %212 = vmatprep.subr.mxu0 0.0
    %213 = vmatpush1.msra.mxu0 0.0
    %214 = vmatprep.subr.mxu0 0.0
    %215 = vmatpush1.msra.mxu0 0.0
    %216 = vmatprep.subr.mxu0 0.0
    %217 = vmatpush1.msra.mxu0 0.0
    %218 = vmatprep.subr.mxu0 0.0
    %219 = vmatpush1.msra.mxu0 0.0
    %220 = vmatprep.subr.mxu0 0.0
    %221 = vmatpush1.msra.mxu0 0.0
    %222 = vmatprep.subr.mxu0 0.0
    %223 = vmatpush1.msra.mxu0 0.0
    %224 = vmatprep.subr.mxu0 0.0
    %225 = vmatpush1.msra.mxu0 0.0
    %226 = vmatprep.subr.mxu0 0.0
    %227 = vmatpush1.msra.mxu0 0.0
    %228 = vmatprep.subr.mxu0 0.0
    %229 = vmatpush1.msra.mxu0 0.0
    %230 = vmatprep.subr.mxu0 0.0
    %231 = vmatpush1.msra.mxu0 0.0
    %232 = vmatprep.subr.mxu0 0.0
    %233 = vmatpush1.msra.mxu0 0.0
    %234 = vmatprep.subr.mxu0 0.0
    %235 = vmatpush1.msra.mxu0 0.0
    %236 = vmatprep.subr.mxu0 0.0
    %237 = vmatpush1.msra.mxu0 0.0
    %238 = vmatprep.subr.mxu0 0.0
    %239 = vmatpush1.msra.mxu0 0.0
    %240 = vmatprep.subr.mxu0 0.0
    %241 = vmatpush1.msra.mxu0 0.0
    %242 = vmatprep.subr.mxu0 0.0
    %243 = vmatpush1.msra.mxu0 0.0
    %244 = vmatprep.subr.mxu0 0.0
    %245 = vmatpush1.msra.mxu0 0.0
    %246 = vmatprep.subr.mxu0 0.0
    %247 = vmatpush1.msra.mxu0 0.0
    %248 = vmatprep.subr.mxu0 0.0
    %249 = vmatpush1.msra.mxu0 0.0
    %250 = vmatprep.subr.mxu0 0.0
    %251 = vmatpush1.msra.mxu0 0.0
    %252 = vmatprep.subr.mxu0 0.0
    %253 = vmatpush1.msra.mxu0 0.0
    %254 = vmatprep.subr.mxu0 0.0
    %255 = vmatpush1.msra.mxu0 0.0
    %256 = vmatprep.subr.mxu0 0.0
    %257 = vmatpush1.msra.mxu0 0.0
    %258 = vmatprep.subr.mxu0 0.0
    %259 = vmatpush1.msra.mxu0 0.0
    %260 = vmatprep.subr.mxu0 0.0
    %261 = vmatpush1.msra.mxu0 0.0
    %262 = vmatprep.subr.mxu0 0.0
    %263 = vmatpush1.msra.mxu0 0.0
    %264 = vmatprep.subr.mxu0 0.0
    %265 = vmatpush1.msra.mxu0 0.0
    %266 = vmatprep.mubr.f32.mxu0 0.0
    %267 = vmatmul.mubr.f32.gmra.mrb[0].mxu0 %v129
    %v268 = vpop.f32.mrb[0].mxu0
    %v269 = vadd.f32 0.0, %v268
    %v270 = vpop.f32.mrb[0].mxu0
    %v271 = vadd.f32 0.0, %v270
    %272 = vdwg.mxu0
    %273 = vmatprep.subr.mxu0 %v100
    %274 = vmatpush1.msra.mxu0 %v99
    %275 = vmatprep.subr.mxu0 %v108
    %276 = vmatpush1.msra.mxu0 %v107
    %277 = vmatprep.subr.mxu0 %v116
    %278 = vmatpush1.msra.mxu0 %v115
    %279 = vmatprep.subr.mxu0 %v124
    %280 = vmatpush1.msra.mxu0 %v123
    %281 = vmatprep.subr.mxu0 0.0
    %282 = vmatpush1.msra.mxu0 0.0
    %283 = vmatprep.subr.mxu0 0.0
    %284 = vmatpush1.msra.mxu0 0.0
    %285 = vmatprep.subr.mxu0 0.0
    %286 = vmatpush1.msra.mxu0 0.0
    %287 = vmatprep.subr.mxu0 0.0
    %288 = vmatpush1.msra.mxu0 0.0
    %289 = vmatprep.subr.mxu0 0.0
    %290 = vmatpush1.msra.mxu0 0.0
    %291 = vmatprep.subr.mxu0 0.0
    %292 = vmatpush1.msra.mxu0 0.0
    %293 = vmatprep.subr.mxu0 0.0
    %294 = vmatpush1.msra.mxu0 0.0
    %295 = vmatprep.subr.mxu0 0.0
    %296 = vmatpush1.msra.mxu0 0.0
    %297 = vmatprep.subr.mxu0 0.0
    %298 = vmatpush1.msra.mxu0 0.0
    %299 = vmatprep.subr.mxu0 0.0
    %300 = vmatpush1.msra.mxu0 0.0
    %301 = vmatprep.subr.mxu0 0.0
    %302 = vmatpush1.msra.mxu0 0.0
    %303 = vmatprep.subr.mxu0 0.0
    %304 = vmatpush1.msra.mxu0 0.0
    %305 = vmatprep.subr.mxu0 0.0
    %306 = vmatpush1.msra.mxu0 0.0
    %307 = vmatprep.subr.mxu0 0.0
    %308 = vmatpush1.msra.mxu0 0.0
    %309 = vmatprep.subr.mxu0 0.0
    %310 = vmatpush1.msra.mxu0 0.0
    %311 = vmatprep.subr.mxu0 0.0
    %312 = vmatpush1.msra.mxu0 0.0
    %313 = vmatprep.subr.mxu0 0.0
    %314 = vmatpush1.msra.mxu0 0.0
    %315 = vmatprep.subr.mxu0 0.0
    %316 = vmatpush1.msra.mxu0 0.0
    %317 = vmatprep.subr.mxu0 0.0
    %318 = vmatpush1.msra.mxu0 0.0
    %319 = vmatprep.subr.mxu0 0.0
    %320 = vmatpush1.msra.mxu0 0.0
    %321 = vmatprep.subr.mxu0 0.0
    %322 = vmatpush1.msra.mxu0 0.0
    %323 = vmatprep.subr.mxu0 0.0
    %324 = vmatpush1.msra.mxu0 0.0
    %325 = vmatprep.subr.mxu0 0.0
    %326 = vmatpush1.msra.mxu0 0.0
    %327 = vmatprep.subr.mxu0 0.0
    %328 = vmatpush1.msra.mxu0 0.0
    %329 = vmatprep.subr.mxu0 0.0
    %330 = vmatpush1.msra.mxu0 0.0
    %331 = vmatprep.subr.mxu0 0.0
    %332 = vmatpush1.msra.mxu0 0.0
    %333 = vmatprep.subr.mxu0 0.0
    %334 = vmatpush1.msra.mxu0 0.0
    %335 = vmatprep.subr.mxu0 0.0
    %336 = vmatpush1.msra.mxu0 0.0
    %337 = vmatprep.mubr.f32.mxu0 0.0
    %338 = vmatmul.mubr.f32.gmra.mrb[0].mxu0 %v129
    %v339 = vpop.f32.mrb[0].mxu0
    %v340 = vadd.f32 0.0, %v339
    %v341 = vpop.f32.mrb[0].mxu0
    %v342 = vadd.f32 0.0, %v341
    %343 = vdwg.mxu0
    %344 = vmatprep.subr.mxu0 %v102
    %345 = vmatpush1.msra.mxu0 %v101
    %346 = vmatprep.subr.mxu0 %v110
    %347 = vmatpush1.msra.mxu0 %v109
    %348 = vmatprep.subr.mxu0 %v118
    %349 = vmatpush1.msra.mxu0 %v117
    %350 = vmatprep.subr.mxu0 %v126
    %351 = vmatpush1.msra.mxu0 %v125
    %352 = vmatprep.subr.mxu0 0.0
    %353 = vmatpush1.msra.mxu0 0.0
    %354 = vmatprep.subr.mxu0 0.0
    %355 = vmatpush1.msra.mxu0 0.0
    %356 = vmatprep.subr.mxu0 0.0
    %357 = vmatpush1.msra.mxu0 0.0
    %358 = vmatprep.subr.mxu0 0.0
    %359 = vmatpush1.msra.mxu0 0.0
    %360 = vmatprep.subr.mxu0 0.0
    %361 = vmatpush1.msra.mxu0 0.0
    %362 = vmatprep.subr.mxu0 0.0
    %363 = vmatpush1.msra.mxu0 0.0
    %364 = vmatprep.subr.mxu0 0.0
    %365 = vmatpush1.msra.mxu0 0.0
    %366 = vmatprep.subr.mxu0 0.0
    %367 = vmatpush1.msra.mxu0 0.0
    %368 = vmatprep.subr.mxu0 0.0
    %369 = vmatpush1.msra.mxu0 0.0
    %370 = vmatprep.subr.mxu0 0.0
    %371 = vmatpush1.msra.mxu0 0.0
    %372 = vmatprep.subr.mxu0 0.0
    %373 = vmatpush1.msra.mxu0 0.0
    %374 = vmatprep.subr.mxu0 0.0
    %375 = vmatpush1.msra.mxu0 0.0
    %376 = vmatprep.subr.mxu0 0.0
    %377 = vmatpush1.msra.mxu0 0.0
    %378 = vmatprep.subr.mxu0 0.0
    %379 = vmatpush1.msra.mxu0 0.0
    %380 = vmatprep.subr.mxu0 0.0
    %381 = vmatpush1.msra.mxu0 0.0
    %382 = vmatprep.subr.mxu0 0.0
    %383 = vmatpush1.msra.mxu0 0.0
    %384 = vmatprep.subr.mxu0 0.0
    %385 = vmatpush1.msra.mxu0 0.0
    %386 = vmatprep.subr.mxu0 0.0
    %387 = vmatpush1.msra.mxu0 0.0
    %388 = vmatprep.subr.mxu0 0.0
    %389 = vmatpush1.msra.mxu0 0.0
    %390 = vmatprep.subr.mxu0 0.0
    %391 = vmatpush1.msra.mxu0 0.0
    %392 = vmatprep.subr.mxu0 0.0
    %393 = vmatpush1.msra.mxu0 0.0
    %394 = vmatprep.subr.mxu0 0.0
    %395 = vmatpush1.msra.mxu0 0.0
    %396 = vmatprep.subr.mxu0 0.0
    %397 = vmatpush1.msra.mxu0 0.0
    %398 = vmatprep.subr.mxu0 0.0
    %399 = vmatpush1.msra.mxu0 0.0
    %400 = vmatprep.subr.mxu0 0.0
    %401 = vmatpush1.msra.mxu0 0.0
    %402 = vmatprep.subr.mxu0 0.0
    %403 = vmatpush1.msra.mxu0 0.0
    %404 = vmatprep.subr.mxu0 0.0
    %405 = vmatpush1.msra.mxu0 0.0
    %406 = vmatprep.subr.mxu0 0.0
    %407 = vmatpush1.msra.mxu0 0.0
    %408 = vmatprep.mubr.f32.mxu0 0.0
    %409 = vmatmul.mubr.f32.gmra.mrb[0].mxu0 %v129
    %v410 = vpop.f32.mrb[0].mxu0
    %v411 = vadd.f32 0.0, %v410
    %v412 = vpop.f32.mrb[0].mxu0
    %v413 = vadd.f32 0.0, %v412
    %414 = vdwg.mxu0
    %v415 = vrot.slane %v198, 4
    %v416 = vadd.f32 %v198, %v415
    %v417 = vrot.slane %v416, 2
    %v418 = vadd.f32 %v416, %v417
    %v419 = vrot.slane %v418, 1
    %v420 = vadd.f32 %v418, %v419
    %v421 = vrot.slane %v200, 4
    %v422 = vadd.f32 %v200, %v421
    %v423 = vrot.slane %v422, 2
    %v424 = vadd.f32 %v422, %v423
    %v425 = vrot.slane %v424, 1
    %v426 = vadd.f32 %v424, %v425
    %v427 = vrot.slane %v269, 4
    %v428 = vadd.f32 %v269, %v427
    %v429 = vrot.slane %v428, 2
    %v430 = vadd.f32 %v428, %v429
    %v431 = vrot.slane %v430, 1
    %v432 = vadd.f32 %v430, %v431
    %v433 = vrot.slane %v271, 4
    %v434 = vadd.f32 %v271, %v433
    %v435 = vrot.slane %v434, 2
    %v436 = vadd.f32 %v434, %v435
    %v437 = vrot.slane %v436, 1
    %v438 = vadd.f32 %v436, %v437
    %v439 = vrot.slane %v340, 4
    %v440 = vadd.f32 %v340, %v439
    %v441 = vrot.slane %v440, 2
    %v442 = vadd.f32 %v440, %v441
    %v443 = vrot.slane %v442, 1
    %v444 = vadd.f32 %v442, %v443
    %v445 = vrot.slane %v342, 4
    %v446 = vadd.f32 %v342, %v445
    %v447 = vrot.slane %v446, 2
    %v448 = vadd.f32 %v446, %v447
    %v449 = vrot.slane %v448, 1
    %v450 = vadd.f32 %v448, %v449
    %v451 = vrot.slane %v411, 4
    %v452 = vadd.f32 %v411, %v451
    %v453 = vrot.slane %v452, 2
    %v454 = vadd.f32 %v452, %v453
    %v455 = vrot.slane %v454, 1
    %v456 = vadd.f32 %v454, %v455
    %v457 = vrot.slane %v413, 4
    %v458 = vadd.f32 %v413, %v457
    %v459 = vrot.slane %v458, 2
    %v460 = vadd.f32 %v458, %v459
    %v461 = vrot.slane %v460, 1
    %v462 = vadd.f32 %v460, %v461
    %v463 = vrcp.pop 8.0
    %v464 = vmul.f32 %v420, %v463
    %v465 = vmul.f32 %v426, %v463
    %v466 = vmul.f32 %v432, %v463
    %v467 = vmul.f32 %v438, %v463
    %v468 = vmul.f32 %v444, %v463
    %v469 = vmul.f32 %v450, %v463
    %v470 = vmul.f32 %v456, %v463
    %v471 = vmul.f32 %v462, %v463
    %v472 = vmul.f32 %v198, %v198
    %v473 = vmul.f32 %v200, %v200
    %v474 = vmul.f32 %v269, %v269
    %v475 = vmul.f32 %v271, %v271
    %v476 = vmul.f32 %v340, %v340
    %v477 = vmul.f32 %v342, %v342
    %v478 = vmul.f32 %v411, %v411
    %v479 = vmul.f32 %v413, %v413
    %v480 = vrot.slane %v472, 4
    %v481 = vadd.f32 %v472, %v480
    %v482 = vrot.slane %v481, 2
    %v483 = vadd.f32 %v481, %v482
    %v484 = vrot.slane %v483, 1
    %v485 = vadd.f32 %v483, %v484
    %v486 = vrot.slane %v473, 4
    %v487 = vadd.f32 %v473, %v486
    %v488 = vrot.slane %v487, 2
    %v489 = vadd.f32 %v487, %v488
    %v490 = vrot.slane %v489, 1
    %v491 = vadd.f32 %v489, %v490
    %v492 = vrot.slane %v474, 4
    %v493 = vadd.f32 %v474, %v492
    %v494 = vrot.slane %v493, 2
    %v495 = vadd.f32 %v493, %v494
    %v496 = vrot.slane %v495, 1
    %v497 = vadd.f32 %v495, %v496
    %v498 = vrot.slane %v475, 4
    %v499 = vadd.f32 %v475, %v498
    %v500 = vrot.slane %v499, 2
    %v501 = vadd.f32 %v499, %v500
    %v502 = vrot.slane %v501, 1
    %v503 = vadd.f32 %v501, %v502
    %v504 = vrot.slane %v476, 4
    %v505 = vadd.f32 %v476, %v504
    %v506 = vrot.slane %v505, 2
    %v507 = vadd.f32 %v505, %v506
    %v508 = vrot.slane %v507, 1
    %v509 = vadd.f32 %v507, %v508
    %v510 = vrot.slane %v477, 4
    %v511 = vadd.f32 %v477, %v510
    %v512 = vrot.slane %v511, 2
    %v513 = vadd.f32 %v511, %v512
    %v514 = vrot.slane %v513, 1
    %v515 = vadd.f32 %v513, %v514
    %v516 = vrot.slane %v478, 4
    %v517 = vadd.f32 %v478, %v516
    %v518 = vrot.slane %v517, 2
    %v519 = vadd.f32 %v517, %v518
    %v520 = vrot.slane %v519, 1
    %v521 = vadd.f32 %v519, %v520
    %v522 = vrot.slane %v479, 4
    %v523 = vadd.f32 %v479, %v522
    %v524 = vrot.slane %v523, 2
    %v525 = vadd.f32 %v523, %v524
    %v526 = vrot.slane %v525, 1
    %v527 = vadd.f32 %v525, %v526
    %v528 = vmul.f32 %v485, %v463
    %v529 = vmul.f32 %v491, %v463
    %v530 = vmul.f32 %v497, %v463
    %v531 = vmul.f32 %v503, %v463
    %v532 = vmul.f32 %v509, %v463
    %v533 = vmul.f32 %v515, %v463
    %v534 = vmul.f32 %v521, %v463
    %v535 = vmul.f32 %v527, %v463
    %v536 = vmul.f32 %v464, %v464
    %v537 = vmul.f32 %v465, %v465
    %v538 = vmul.f32 %v466, %v466
    %v539 = vmul.f32 %v467, %v467
    %v540 = vmul.f32 %v468, %v468
    %v541 = vmul.f32 %v469, %v469
    %v542 = vmul.f32 %v470, %v470
    %v543 = vmul.f32 %v471, %v471
    %v544 = vsub.f32 %v528, %v536
    %v545 = vsub.f32 %v529, %v537
    %v546 = vsub.f32 %v530, %v538
    %v547 = vsub.f32 %v531, %v539
    %v548 = vsub.f32 %v532, %v540
    %v549 = vsub.f32 %v533, %v541
    %v550 = vsub.f32 %v534, %v542
    %v551 = vsub.f32 %v535, %v543
    %v552 = vmax.f32 %v544, 0.0
    %v553 = vmax.f32 %v545, 0.0
    %v554 = vmax.f32 %v546, 0.0
    %v555 = vmax.f32 %v547, 0.0
    %v556 = vmax.f32 %v548, 0.0
    %v557 = vmax.f32 %v549, 0.0
    %v558 = vmax.f32 %v550, 0.0
    %v559 = vmax.f32 %v551, 0.0
    %v560 = vsub.f32 %v198, %v464
    %v561 = vsub.f32 %v200, %v465
    %v562 = vsub.f32 %v269, %v466
    %v563 = vsub.f32 %v271, %v467
    %v564 = vsub.f32 %v340, %v468
    %v565 = vsub.f32 %v342, %v469
    %v566 = vsub.f32 %v411, %v470
    %v567 = vsub.f32 %v413, %v471
    %v568 = vadd.f32 %v552, 1e-05
    %v569 = vadd.f32 %v553, 1e-05
    %v570 = vadd.f32 %v554, 1e-05
    %v571 = vadd.f32 %v555, 1e-05
    %v572 = vadd.f32 %v556, 1e-05
    %v573 = vadd.f32 %v557, 1e-05
    %v574 = vadd.f32 %v558, 1e-05
    %v575 = vadd.f32 %v559, 1e-05
    %v576 = vrsqrt.pop %v568
    %v577 = vrsqrt.pop %v569
    %v578 = vrsqrt.pop %v570
    %v579 = vrsqrt.pop %v571
    %v580 = vrsqrt.pop %v572
    %v581 = vrsqrt.pop %v573
    %v582 = vrsqrt.pop %v574
    %v583 = vrsqrt.pop %v575
    %v584 = vmul.f32 %v560, %v576
    %v585 = vmul.f32 %v561, %v577
    %v586 = vmul.f32 %v562, %v578
    %v587 = vmul.f32 %v563, %v579
    %v588 = vmul.f32 %v564, %v580
    %v589 = vmul.f32 %v565, %v581
    %v590 = vmul.f32 %v566, %v582
    %v591 = vmul.f32 %v567, %v583
    %v594 = vlaneseq
    %v595 = vshrl.u32 %v594, 7
    %v596 = vsub.s32 0, %v595
    %v597 = vrot.slane %v92, %v596
    %v598 = vlaneseq
    %v599 = vshrl.u32 %v598, 7
    %v600 = vsub.s32 2, %v599
    %v601 = vrot.slane %v92, %v600
    %v602 = vlaneseq
    %v603 = vshrl.u32 %v602, 7
    %v604 = vsub.s32 4, %v603
    %v605 = vrot.slane %v92, %v604
    %v606 = vlaneseq
    %v607 = vshrl.u32 %v606, 7
    %v608 = vsub.s32 6, %v607
    %v609 = vrot.slane %v92, %v608
    %v610 = vlaneseq
    %v611 = vshrl.u32 %v610, 7
    %v612 = vsub.s32 0, %v611
    %v613 = vrot.slane %v93, %v612
    %v614 = vlaneseq
    %v615 = vshrl.u32 %v614, 7
    %v616 = vsub.s32 2, %v615
    %v617 = vrot.slane %v93, %v616
    %v618 = vlaneseq
    %v619 = vshrl.u32 %v618, 7
    %v620 = vsub.s32 4, %v619
    %v621 = vrot.slane %v93, %v620
    %v622 = vlaneseq
    %v623 = vshrl.u32 %v622, 7
    %v624 = vsub.s32 6, %v623
    %v625 = vrot.slane %v93, %v624
    %v634 = vlaneseq
    %v635 = vshrl.u32 %v634, 7
    %v636 = vsub.s32 0, %v635
    %v637 = vrot.slane %v597, %v636
    %v638 = vlaneseq
    %v639 = vshrl.u32 %v638, 7
    %v640 = vsub.s32 0, %v639
    %v641 = vrot.slane %v601, %v640
    %v642 = vlaneseq
    %v643 = vshrl.u32 %v642, 7
    %v644 = vsub.s32 0, %v643
    %v645 = vrot.slane %v605, %v644
    %v646 = vlaneseq
    %v647 = vshrl.u32 %v646, 7
    %v648 = vsub.s32 0, %v647
    %v649 = vrot.slane %v609, %v648
    %v650 = vlaneseq
    %v651 = vshrl.u32 %v650, 7
    %v652 = vsub.s32 0, %v651
    %v653 = vrot.slane %v613, %v652
    %v654 = vlaneseq
    %v655 = vshrl.u32 %v654, 7
    %v656 = vsub.s32 0, %v655
    %v657 = vrot.slane %v617, %v656
    %v658 = vlaneseq
    %v659 = vshrl.u32 %v658, 7
    %v660 = vsub.s32 0, %v659
    %v661 = vrot.slane %v621, %v660
    %v662 = vlaneseq
    %v663 = vshrl.u32 %v662, 7
    %v664 = vsub.s32 0, %v663
    %v665 = vrot.slane %v625, %v664
    %v666 = vmul.f32 %v584, %v637
    %v667 = vmul.f32 %v585, %v641
    %v668 = vmul.f32 %v586, %v645
    %v669 = vmul.f32 %v587, %v649
    %v670 = vmul.f32 %v588, %v653
    %v671 = vmul.f32 %v589, %v657
    %v672 = vmul.f32 %v590, %v661
    %v673 = vmul.f32 %v591, %v665
    %v674 = vlaneseq
    %v675 = vshrl.u32 %v674, 7
    %v676 = vsub.s32 1, %v675
    %v677 = vrot.slane %v92, %v676
    %v678 = vlaneseq
    %v679 = vshrl.u32 %v678, 7
    %v680 = vsub.s32 3, %v679
    %v681 = vrot.slane %v92, %v680
    %v682 = vlaneseq
    %v683 = vshrl.u32 %v682, 7
    %v684 = vsub.s32 5, %v683
    %v685 = vrot.slane %v92, %v684
    %v686 = vlaneseq
    %v687 = vshrl.u32 %v686, 7
    %v688 = vsub.s32 7, %v687
    %v689 = vrot.slane %v92, %v688
    %v690 = vlaneseq
    %v691 = vshrl.u32 %v690, 7
    %v692 = vsub.s32 1, %v691
    %v693 = vrot.slane %v93, %v692
    %v694 = vlaneseq
    %v695 = vshrl.u32 %v694, 7
    %v696 = vsub.s32 3, %v695
    %v697 = vrot.slane %v93, %v696
    %v698 = vlaneseq
    %v699 = vshrl.u32 %v698, 7
    %v700 = vsub.s32 5, %v699
    %v701 = vrot.slane %v93, %v700
    %v702 = vlaneseq
    %v703 = vshrl.u32 %v702, 7
    %v704 = vsub.s32 7, %v703
    %v705 = vrot.slane %v93, %v704
    %v714 = vlaneseq
    %v715 = vshrl.u32 %v714, 7
    %v716 = vsub.s32 1, %v715
    %v717 = vrot.slane %v677, %v716
    %v718 = vlaneseq
    %v719 = vshrl.u32 %v718, 7
    %v720 = vsub.s32 1, %v719
    %v721 = vrot.slane %v681, %v720
    %v722 = vlaneseq
    %v723 = vshrl.u32 %v722, 7
    %v724 = vsub.s32 1, %v723
    %v725 = vrot.slane %v685, %v724
    %v726 = vlaneseq
    %v727 = vshrl.u32 %v726, 7
    %v728 = vsub.s32 1, %v727
    %v729 = vrot.slane %v689, %v728
    %v730 = vlaneseq
    %v731 = vshrl.u32 %v730, 7
    %v732 = vsub.s32 1, %v731
    %v733 = vrot.slane %v693, %v732
    %v734 = vlaneseq
    %v735 = vshrl.u32 %v734, 7
    %v736 = vsub.s32 1, %v735
    %v737 = vrot.slane %v697, %v736
    %v738 = vlaneseq
    %v739 = vshrl.u32 %v738, 7
    %v740 = vsub.s32 1, %v739
    %v741 = vrot.slane %v701, %v740
    %v742 = vlaneseq
    %v743 = vshrl.u32 %v742, 7
    %v744 = vsub.s32 1, %v743
    %v745 = vrot.slane %v705, %v744
    %v746 = vadd.f32 %v666, %v717
    %v747 = vadd.f32 %v667, %v721
    %v748 = vadd.f32 %v668, %v725
    %v749 = vadd.f32 %v669, %v729
    %v750 = vadd.f32 %v670, %v733
    %v751 = vadd.f32 %v671, %v737
    %v752 = vadd.f32 %v672, %v741
    %v753 = vadd.f32 %v673, %v745
    %v754 = vmax.f32 %v746, 0.0
    %v755 = vmax.f32 %v747, 0.0
    %v756 = vmax.f32 %v748, 0.0
    %v757 = vmax.f32 %v749, 0.0
    %v758 = vmax.f32 %v750, 0.0
    %v759 = vmax.f32 %v751, 0.0
    %v760 = vmax.f32 %v752, 0.0
    %v761 = vmax.f32 %v753, 0.0
    %762 = vst [vmem:[#allocation11] sm:$0xff] %v754
    %763 = vst [vmem:[#allocation11 + $0x8] sm:$0xff] %v755
    %764 = vst [vmem:[#allocation11 + $0x10] sm:$0xff] %v756
    %765 = vst [vmem:[#allocation11 + $0x18] sm:$0xff] %v757
    %766 = vst [vmem:[#allocation11 + $0x20] sm:$0xff] %v758
    %767 = vst [vmem:[#allocation11 + $0x28] sm:$0xff] %v759
    %768 = vst [vmem:[#allocation11 + $0x30] sm:$0xff] %v760
    %769 = vst [vmem:[#allocation11 + $0x38] sm:$0xff] %v761
    %v770 = vld [vmem:[#allocation8] sm:$0xff]
    %v771 = vld [vmem:[#allocation8 + $0x8] sm:$0xff]
    %v772 = vld [vmem:[#allocation8 + $0x10] sm:$0xff]
    %v773 = vld [vmem:[#allocation8 + $0x18] sm:$0xff]
    %v774 = vld [vmem:[#allocation8 + $0x20] sm:$0xff]
    %v775 = vld [vmem:[#allocation8 + $0x28] sm:$0xff]
    %v776 = vld [vmem:[#allocation8 + $0x30] sm:$0xff]
    %v777 = vld [vmem:[#allocation8 + $0x38] sm:$0xff]
    %v778 = vld [vmem:[#allocation8 + $0x40] sm:$0xff]
    %v779 = vld [vmem:[#allocation8 + $0x48] sm:$0xff]
    %v780 = vld [vmem:[#allocation8 + $0x50] sm:$0xff]
    %v781 = vld [vmem:[#allocation8 + $0x58] sm:$0xff]
    %v782 = vld [vmem:[#allocation8 + $0x60] sm:$0xff]
    %v783 = vld [vmem:[#allocation8 + $0x68] sm:$0xff]
    %v784 = vld [vmem:[#allocation8 + $0x70] sm:$0xff]
    %v785 = vld [vmem:[#allocation8 + $0x78] sm:$0xff]
    %v786 = vld [vmem:[#allocation8 + $0x80] sm:$0xff]
    %v787 = vld [vmem:[#allocation8 + $0x88] sm:$0xff]
    %v788 = vld [vmem:[#allocation8 + $0x90] sm:$0xff]
    %v789 = vld [vmem:[#allocation8 + $0x98] sm:$0xff]
    %v790 = vld [vmem:[#allocation8 + $0xa0] sm:$0xff]
    %v791 = vld [vmem:[#allocation8 + $0xa8] sm:$0xff]
    %v792 = vld [vmem:[#allocation8 + $0xb0] sm:$0xff]
    %v793 = vld [vmem:[#allocation8 + $0xb8] sm:$0xff]
    %v794 = vld [vmem:[#allocation8 + $0xc0] sm:$0xff]
    %v795 = vld [vmem:[#allocation8 + $0xc8] sm:$0xff]
    %v796 = vld [vmem:[#allocation8 + $0xd0] sm:$0xff]
    %v797 = vld [vmem:[#allocation8 + $0xd8] sm:$0xff]
    %v798 = vld [vmem:[#allocation8 + $0xe0] sm:$0xff]
    %v799 = vld [vmem:[#allocation8 + $0xe8] sm:$0xff]
    %v800 = vld [vmem:[#allocation8 + $0xf0] sm:$0xff]
    %v801 = vld [vmem:[#allocation8 + $0xf8] sm:$0xff]
    %v802 = vld [vmem:[#allocation8 + $0x100] sm:$0xff]
    %v803 = vld [vmem:[#allocation8 + $0x108] sm:$0xff]
    %v804 = vld [vmem:[#allocation8 + $0x110] sm:$0xff]
    %v805 = vld [vmem:[#allocation8 + $0x118] sm:$0xff]
    %v806 = vld [vmem:[#allocation8 + $0x120] sm:$0xff]
    %v807 = vld [vmem:[#allocation8 + $0x128] sm:$0xff]
    %v808 = vld [vmem:[#allocation8 + $0x130] sm:$0xff]
    %v809 = vld [vmem:[#allocation8 + $0x138] sm:$0xff]
    %v810 = vld [vmem:[#allocation8 + $0x140] sm:$0xff]
    %v811 = vld [vmem:[#allocation8 + $0x148] sm:$0xff]
    %v812 = vld [vmem:[#allocation8 + $0x150] sm:$0xff]
    %v813 = vld [vmem:[#allocation8 + $0x158] sm:$0xff]
    %v814 = vld [vmem:[#allocation8 + $0x160] sm:$0xff]
    %v815 = vld [vmem:[#allocation8 + $0x168] sm:$0xff]
    %v816 = vld [vmem:[#allocation8 + $0x170] sm:$0xff]
    %v817 = vld [vmem:[#allocation8 + $0x178] sm:$0xff]
    %v818 = vld [vmem:[#allocation8 + $0x180] sm:$0xff]
    %v819 = vld [vmem:[#allocation8 + $0x188] sm:$0xff]
    %v820 = vld [vmem:[#allocation8 + $0x190] sm:$0xff]
    %v821 = vld [vmem:[#allocation8 + $0x198] sm:$0xff]
    %v822 = vld [vmem:[#allocation8 + $0x1a0] sm:$0xff]
    %v823 = vld [vmem:[#allocation8 + $0x1a8] sm:$0xff]
    %v824 = vld [vmem:[#allocation8 + $0x1b0] sm:$0xff]
    %v825 = vld [vmem:[#allocation8 + $0x1b8] sm:$0xff]
    %v826 = vld [vmem:[#allocation8 + $0x1c0] sm:$0xff]
    %v827 = vld [vmem:[#allocation8 + $0x1c8] sm:$0xff]
    %v828 = vld [vmem:[#allocation8 + $0x1d0] sm:$0xff]
    %v829 = vld [vmem:[#allocation8 + $0x1d8] sm:$0xff]
    %v830 = vld [vmem:[#allocation8 + $0x1e0] sm:$0xff]
    %v831 = vld [vmem:[#allocation8 + $0x1e8] sm:$0xff]
    %v832 = vld [vmem:[#allocation8 + $0x1f0] sm:$0xff]
    %v833 = vld [vmem:[#allocation8 + $0x1f8] sm:$0xff]
    %v834 = vld [vmem:[#allocation8 + $0x200] sm:$0xff]
    %v835 = vld [vmem:[#allocation8 + $0x208] sm:$0xff]
    %v836 = vld [vmem:[#allocation8 + $0x210] sm:$0xff]
    %v837 = vld [vmem:[#allocation8 + $0x218] sm:$0xff]
    %v838 = vld [vmem:[#allocation8 + $0x220] sm:$0xff]
    %v839 = vld [vmem:[#allocation8 + $0x228] sm:$0xff]
    %v840 = vld [vmem:[#allocation8 + $0x230] sm:$0xff]
    %v841 = vld [vmem:[#allocation8 + $0x238] sm:$0xff]
    %v842 = vld [vmem:[#allocation8 + $0x240] sm:$0xff]
    %v843 = vld [vmem:[#allocation8 + $0x248] sm:$0xff]
    %v844 = vld [vmem:[#allocation8 + $0x250] sm:$0xff]
    %v845 = vld [vmem:[#allocation8 + $0x258] sm:$0xff]
    %v846 = vld [vmem:[#allocation8 + $0x260] sm:$0xff]
    %v847 = vld [vmem:[#allocation8 + $0x268] sm:$0xff]
    %v848 = vld [vmem:[#allocation8 + $0x270] sm:$0xff]
    %v849 = vld [vmem:[#allocation8 + $0x278] sm:$0xff]
    %v850 = vld [vmem:[#allocation8 + $0x280] sm:$0xff]
    %v851 = vld [vmem:[#allocation8 + $0x288] sm:$0xff]
    %v852 = vld [vmem:[#allocation8 + $0x290] sm:$0xff]
    %v853 = vld [vmem:[#allocation8 + $0x298] sm:$0xff]
    %v854 = vld [vmem:[#allocation8 + $0x2a0] sm:$0xff]
    %v855 = vld [vmem:[#allocation8 + $0x2a8] sm:$0xff]
    %v856 = vld [vmem:[#allocation8 + $0x2b0] sm:$0xff]
    %v857 = vld [vmem:[#allocation8 + $0x2b8] sm:$0xff]
    %v858 = vld [vmem:[#allocation8 + $0x2c0] sm:$0xff]
    %v859 = vld [vmem:[#allocation8 + $0x2c8] sm:$0xff]
    %v860 = vld [vmem:[#allocation8 + $0x2d0] sm:$0xff]
    %v861 = vld [vmem:[#allocation8 + $0x2d8] sm:$0xff]
    %v862 = vld [vmem:[#allocation8 + $0x2e0] sm:$0xff]
    %v863 = vld [vmem:[#allocation8 + $0x2e8] sm:$0xff]
    %v864 = vld [vmem:[#allocation8 + $0x2f0] sm:$0xff]
    %v865 = vld [vmem:[#allocation8 + $0x2f8] sm:$0xff]
    %v866 = vld [vmem:[#allocation8 + $0x300] sm:$0xff]
    %v867 = vld [vmem:[#allocation8 + $0x308] sm:$0xff]
    %v868 = vld [vmem:[#allocation8 + $0x310] sm:$0xff]
    %v869 = vld [vmem:[#allocation8 + $0x318] sm:$0xff]
    %v870 = vld [vmem:[#allocation8 + $0x320] sm:$0xff]
    %v871 = vld [vmem:[#allocation8 + $0x328] sm:$0xff]
    %v872 = vld [vmem:[#allocation8 + $0x330] sm:$0xff]
    %v873 = vld [vmem:[#allocation8 + $0x338] sm:$0xff]
    %v874 = vld [vmem:[#allocation8 + $0x340] sm:$0xff]
    %v875 = vld [vmem:[#allocation8 + $0x348] sm:$0xff]
    %v876 = vld [vmem:[#allocation8 + $0x350] sm:$0xff]
    %v877 = vld [vmem:[#allocation8 + $0x358] sm:$0xff]
    %v878 = vld [vmem:[#allocation8 + $0x360] sm:$0xff]
    %v879 = vld [vmem:[#allocation8 + $0x368] sm:$0xff]
    %v880 = vld [vmem:[#allocation8 + $0x370] sm:$0xff]
    %v881 = vld [vmem:[#allocation8 + $0x378] sm:$0xff]
    %v882 = vld [vmem:[#allocation8 + $0x380] sm:$0xff]
    %v883 = vld [vmem:[#allocation8 + $0x388] sm:$0xff]
    %v884 = vld [vmem:[#allocation8 + $0x390] sm:$0xff]
    %v885 = vld [vmem:[#allocation8 + $0x398] sm:$0xff]
    %v886 = vld [vmem:[#allocation8 + $0x3a0] sm:$0xff]
    %v887 = vld [vmem:[#allocation8 + $0x3a8] sm:$0xff]
    %v888 = vld [vmem:[#allocation8 + $0x3b0] sm:$0xff]
    %v889 = vld [vmem:[#allocation8 + $0x3b8] sm:$0xff]
    %v890 = vld [vmem:[#allocation8 + $0x3c0] sm:$0xff]
    %v891 = vld [vmem:[#allocation8 + $0x3c8] sm:$0xff]
    %v892 = vld [vmem:[#allocation8 + $0x3d0] sm:$0xff]
    %v893 = vld [vmem:[#allocation8 + $0x3d8] sm:$0xff]
    %v894 = vld [vmem:[#allocation8 + $0x3e0] sm:$0xff]
    %v895 = vld [vmem:[#allocation8 + $0x3e8] sm:$0xff]
    %v896 = vld [vmem:[#allocation8 + $0x3f0] sm:$0xff]
    %v897 = vld [vmem:[#allocation8 + $0x3f8] sm:$0xff]
    %898 = vmatprep.subr.mxu0 0.0
    %899 = vmatpush1.msra.mxu0 %v770
    %900 = vmatprep.subr.mxu0 0.0
    %901 = vmatpush1.msra.mxu0 %v771
    %902 = vmatprep.subr.mxu0 0.0
    %903 = vmatpush1.msra.mxu0 %v772
    %904 = vmatprep.subr.mxu0 0.0
    %905 = vmatpush1.msra.mxu0 %v773
    %906 = vmatprep.subr.mxu0 0.0
    %907 = vmatpush1.msra.mxu0 %v774
    %908 = vmatprep.subr.mxu0 0.0
    %909 = vmatpush1.msra.mxu0 %v775
    %910 = vmatprep.subr.mxu0 0.0
    %911 = vmatpush1.msra.mxu0 %v776
    %912 = vmatprep.subr.mxu0 0.0
    %913 = vmatpush1.msra.mxu0 %v777
    %914 = vmatprep.subr.mxu0 0.0
    %915 = vmatpush1.msra.mxu0 %v778
    %916 = vmatprep.subr.mxu0 0.0
    %917 = vmatpush1.msra.mxu0 %v779
    %918 = vmatprep.subr.mxu0 0.0
    %919 = vmatpush1.msra.mxu0 %v780
    %920 = vmatprep.subr.mxu0 0.0
    %921 = vmatpush1.msra.mxu0 %v781
    %922 = vmatprep.subr.mxu0 0.0
    %923 = vmatpush1.msra.mxu0 %v782
    %924 = vmatprep.subr.mxu0 0.0
    %925 = vmatpush1.msra.mxu0 %v783
    %926 = vmatprep.subr.mxu0 0.0
    %927 = vmatpush1.msra.mxu0 %v784
    %928 = vmatprep.subr.mxu0 0.0
    %929 = vmatpush1.msra.mxu0 %v785
    %930 = vmatprep.subr.mxu0 0.0
    %931 = vmatpush1.msra.mxu0 %v786
    %932 = vmatprep.subr.mxu0 0.0
    %933 = vmatpush1.msra.mxu0 %v787
    %934 = vmatprep.subr.mxu0 0.0
    %935 = vmatpush1.msra.mxu0 %v788
    %936 = vmatprep.subr.mxu0 0.0
    %937 = vmatpush1.msra.mxu0 %v789
    %938 = vmatprep.subr.mxu0 0.0
    %939 = vmatpush1.msra.mxu0 %v790
    %940 = vmatprep.subr.mxu0 0.0
    %941 = vmatpush1.msra.mxu0 %v791
    %942 = vmatprep.subr.mxu0 0.0
    %943 = vmatpush1.msra.mxu0 %v792
    %944 = vmatprep.subr.mxu0 0.0
    %945 = vmatpush1.msra.mxu0 %v793
    %946 = vmatprep.subr.mxu0 0.0
    %947 = vmatpush1.msra.mxu0 %v794
    %948 = vmatprep.subr.mxu0 0.0
    %949 = vmatpush1.msra.mxu0 %v795
    %950 = vmatprep.subr.mxu0 0.0
    %951 = vmatpush1.msra.mxu0 %v796
    %952 = vmatprep.subr.mxu0 0.0
    %953 = vmatpush1.msra.mxu0 %v797
    %954 = vmatprep.subr.mxu0 0.0
    %955 = vmatpush1.msra.mxu0 %v798
    %956 = vmatprep.subr.mxu0 0.0
    %957 = vmatpush1.msra.mxu0 %v799
    %958 = vmatprep.subr.mxu0 0.0
    %959 = vmatpush1.msra.mxu0 %v800
    %960 = vmatprep.subr.mxu0 0.0
    %961 = vmatpush1.msra.mxu0 %v801
    %962 = vmatprep.mubr.f32.mxu0 %v755
    %963 = vmatmul.mubr.f32.gmra.mrb[0].mxu0 %v754
    %v964 = vpop.f32.mrb[0].mxu0
    %v965 = vadd.f32 0.0, %v964
    %v966 = vpop.f32.mrb[0].mxu0
    %967 = vdwg.mxu0
    %968 = vmatprep.subr.mxu0 0.0
    %969 = vmatpush1.msra.mxu0 %v802
    %970 = vmatprep.subr.mxu0 0.0
    %971 = vmatpush1.msra.mxu0 %v803
    %972 = vmatprep.subr.mxu0 0.0
    %973 = vmatpush1.msra.mxu0 %v804
    %974 = vmatprep.subr.mxu0 0.0
    %975 = vmatpush1.msra.mxu0 %v805
    %976 = vmatprep.subr.mxu0 0.0
    %977 = vmatpush1.msra.mxu0 %v806
    %978 = vmatprep.subr.mxu0 0.0
    %979 = vmatpush1.msra.mxu0 %v807
    %980 = vmatprep.subr.mxu0 0.0
    %981 = vmatpush1.msra.mxu0 %v808
    %982 = vmatprep.subr.mxu0 0.0
    %983 = vmatpush1.msra.mxu0 %v809
    %984 = vmatprep.subr.mxu0 0.0
    %985 = vmatpush1.msra.mxu0 %v810
    %986 = vmatprep.subr.mxu0 0.0
    %987 = vmatpush1.msra.mxu0 %v811
    %988 = vmatprep.subr.mxu0 0.0
    %989 = vmatpush1.msra.mxu0 %v812
    %990 = vmatprep.subr.mxu0 0.0
    %991 = vmatpush1.msra.mxu0 %v813
    %992 = vmatprep.subr.mxu0 0.0
    %993 = vmatpush1.msra.mxu0 %v814
    %994 = vmatprep.subr.mxu0 0.0
    %995 = vmatpush1.msra.mxu0 %v815
    %996 = vmatprep.subr.mxu0 0.0
    %997 = vmatpush1.msra.mxu0 %v816
    %998 = vmatprep.subr.mxu0 0.0
    %999 = vmatpush1.msra.mxu0 %v817
    %1000 = vmatprep.subr.mxu0 0.0
    %1001 = vmatpush1.msra.mxu0 %v818
    %1002 = vmatprep.subr.mxu0 0.0
    %1003 = vmatpush1.msra.mxu0 %v819
    %1004 = vmatprep.subr.mxu0 0.0
    %1005 = vmatpush1.msra.mxu0 %v820
    %1006 = vmatprep.subr.mxu0 0.0
    %1007 = vmatpush1.msra.mxu0 %v821
    %1008 = vmatprep.subr.mxu0 0.0
    %1009 = vmatpush1.msra.mxu0 %v822
    %1010 = vmatprep.subr.mxu0 0.0
    %1011 = vmatpush1.msra.mxu0 %v823
    %1012 = vmatprep.subr.mxu0 0.0
    %1013 = vmatpush1.msra.mxu0 %v824
    %1014 = vmatprep.subr.mxu0 0.0
    %1015 = vmatpush1.msra.mxu0 %v825
    %1016 = vmatprep.subr.mxu0 0.0
    %1017 = vmatpush1.msra.mxu0 %v826
    %1018 = vmatprep.subr.mxu0 0.0
    %1019 = vmatpush1.msra.mxu0 %v827
    %1020 = vmatprep.subr.mxu0 0.0
    %1021 = vmatpush1.msra.mxu0 %v828
    %1022 = vmatprep.subr.mxu0 0.0
    %1023 = vmatpush1.msra.mxu0 %v829
    %1024 = vmatprep.subr.mxu0 0.0
    %1025 = vmatpush1.msra.mxu0 %v830
    %1026 = vmatprep.subr.mxu0 0.0
    %1027 = vmatpush1.msra.mxu0 %v831
    %1028 = vmatprep.subr.mxu0 0.0
    %1029 = vmatpush1.msra.mxu0 %v832
    %1030 = vmatprep.subr.mxu0 0.0
    %1031 = vmatpush1.msra.mxu0 %v833
    %1032 = vmatprep.mubr.f32.mxu0 %v757
    %1033 = vmatmul.mubr.f32.gmra.mrb[0].mxu0 %v756
    %v1034 = vpop.f32.mrb[0].mxu0
    %v1035 = vadd.f32 %v965, %v1034
    %v1036 = vpop.f32.mrb[0].mxu0
    %1037 = vdwg.mxu0
    %1038 = vmatprep.subr.mxu0 0.0
    %1039 = vmatpush1.msra.mxu0 %v834
    %1040 = vmatprep.subr.mxu0 0.0
    %1041 = vmatpush1.msra.mxu0 %v835
    %1042 = vmatprep.subr.mxu0 0.0
    %1043 = vmatpush1.msra.mxu0 %v836
    %1044 = vmatprep.subr.mxu0 0.0
    %1045 = vmatpush1.msra.mxu0 %v837
    %1046 = vmatprep.subr.mxu0 0.0
    %1047 = vmatpush1.msra.mxu0 %v838
    %1048 = vmatprep.subr.mxu0 0.0
    %1049 = vmatpush1.msra.mxu0 %v839
    %1050 = vmatprep.subr.mxu0 0.0
    %1051 = vmatpush1.msra.mxu0 %v840
    %1052 = vmatprep.subr.mxu0 0.0
    %1053 = vmatpush1.msra.mxu0 %v841
    %1054 = vmatprep.subr.mxu0 0.0
    %1055 = vmatpush1.msra.mxu0 %v842
    %1056 = vmatprep.subr.mxu0 0.0
    %1057 = vmatpush1.msra.mxu0 %v843
    %1058 = vmatprep.subr.mxu0 0.0
    %1059 = vmatpush1.msra.mxu0 %v844
    %1060 = vmatprep.subr.mxu0 0.0
    %1061 = vmatpush1.msra.mxu0 %v845
    %1062 = vmatprep.subr.mxu0 0.0
    %1063 = vmatpush1.msra.mxu0 %v846
    %1064 = vmatprep.subr.mxu0 0.0
    %1065 = vmatpush1.msra.mxu0 %v847
    %1066 = vmatprep.subr.mxu0 0.0
    %1067 = vmatpush1.msra.mxu0 %v848
    %1068 = vmatprep.subr.mxu0 0.0
    %1069 = vmatpush1.msra.mxu0 %v849
    %1070 = vmatprep.subr.mxu0 0.0
    %1071 = vmatpush1.msra.mxu0 %v850
    %1072 = vmatprep.subr.mxu0 0.0
    %1073 = vmatpush1.msra.mxu0 %v851
    %1074 = vmatprep.subr.mxu0 0.0
    %1075 = vmatpush1.msra.mxu0 %v852
    %1076 = vmatprep.subr.mxu0 0.0
    %1077 = vmatpush1.msra.mxu0 %v853
    %1078 = vmatprep.subr.mxu0 0.0
    %1079 = vmatpush1.msra.mxu0 %v854
    %1080 = vmatprep.subr.mxu0 0.0
    %1081 = vmatpush1.msra.mxu0 %v855
    %1082 = vmatprep.subr.mxu0 0.0
    %1083 = vmatpush1.msra.mxu0 %v856
    %1084 = vmatprep.subr.mxu0 0.0
    %1085 = vmatpush1.msra.mxu0 %v857
    %1086 = vmatprep.subr.mxu0 0.0
    %1087 = vmatpush1.msra.mxu0 %v858
    %1088 = vmatprep.subr.mxu0 0.0
    %1089 = vmatpush1.msra.mxu0 %v859
    %1090 = vmatprep.subr.mxu0 0.0
    %1091 = vmatpush1.msra.mxu0 %v860
    %1092 = vmatprep.subr.mxu0 0.0
    %1093 = vmatpush1.msra.mxu0 %v861
    %1094 = vmatprep.subr.mxu0 0.0
    %1095 = vmatpush1.msra.mxu0 %v862
    %1096 = vmatprep.subr.mxu0 0.0
    %1097 = vmatpush1.msra.mxu0 %v863
    %1098 = vmatprep.subr.mxu0 0.0
    %1099 = vmatpush1.msra.mxu0 %v864
    %1100 = vmatprep.subr.mxu0 0.0
    %1101 = vmatpush1.msra.mxu0 %v865
    %1102 = vmatprep.mubr.f32.mxu0 %v759
    %1103 = vmatmul.mubr.f32.gmra.mrb[0].mxu0 %v758
    %v1104 = vpop.f32.mrb[0].mxu0
    %v1105 = vadd.f32 %v1035, %v1104
    %v1106 = vpop.f32.mrb[0].mxu0
    %1107 = vdwg.mxu0
    %1108 = vmatprep.subr.mxu0 0.0
    %1109 = vmatpush1.msra.mxu0 %v866
    %1110 = vmatprep.subr.mxu0 0.0
    %1111 = vmatpush1.msra.mxu0 %v867
    %1112 = vmatprep.subr.mxu0 0.0
    %1113 = vmatpush1.msra.mxu0 %v868
    %1114 = vmatprep.subr.mxu0 0.0
    %1115 = vmatpush1.msra.mxu0 %v869
    %1116 = vmatprep.subr.mxu0 0.0
    %1117 = vmatpush1.msra.mxu0 %v870
    %1118 = vmatprep.subr.mxu0 0.0
    %1119 = vmatpush1.msra.mxu0 %v871
    %1120 = vmatprep.subr.mxu0 0.0
    %1121 = vmatpush1.msra.mxu0 %v872
    %1122 = vmatprep.subr.mxu0 0.0
    %1123 = vmatpush1.msra.mxu0 %v873
    %1124 = vmatprep.subr.mxu0 0.0
    %1125 = vmatpush1.msra.mxu0 %v874
    %1126 = vmatprep.subr.mxu0 0.0
    %1127 = vmatpush1.msra.mxu0 %v875
    %1128 = vmatprep.subr.mxu0 0.0
    %1129 = vmatpush1.msra.mxu0 %v876
    %1130 = vmatprep.subr.mxu0 0.0
    %1131 = vmatpush1.msra.mxu0 %v877
    %1132 = vmatprep.subr.mxu0 0.0
    %1133 = vmatpush1.msra.mxu0 %v878
    %1134 = vmatprep.subr.mxu0 0.0
    %1135 = vmatpush1.msra.mxu0 %v879
    %1136 = vmatprep.subr.mxu0 0.0
    %1137 = vmatpush1.msra.mxu0 %v880
    %1138 = vmatprep.subr.mxu0 0.0
    %1139 = vmatpush1.msra.mxu0 %v881
    %1140 = vmatprep.subr.mxu0 0.0
    %1141 = vmatpush1.msra.mxu0 %v882
    %1142 = vmatprep.subr.mxu0 0.0
    %1143 = vmatpush1.msra.mxu0 %v883
    %1144 = vmatprep.subr.mxu0 0.0
    %1145 = vmatpush1.msra.mxu0 %v884
    %1146 = vmatprep.subr.mxu0 0.0
    %1147 = vmatpush1.msra.mxu0 %v885
    %1148 = vmatprep.subr.mxu0 0.0
    %1149 = vmatpush1.msra.mxu0 %v886
    %1150 = vmatprep.subr.mxu0 0.0
    %1151 = vmatpush1.msra.mxu0 %v887
    %1152 = vmatprep.subr.mxu0 0.0
    %1153 = vmatpush1.msra.mxu0 %v888
    %1154 = vmatprep.subr.mxu0 0.0
    %1155 = vmatpush1.msra.mxu0 %v889
    %1156 = vmatprep.subr.mxu0 0.0
    %1157 = vmatpush1.msra.mxu0 %v890
    %1158 = vmatprep.subr.mxu0 0.0
    %1159 = vmatpush1.msra.mxu0 %v891
    %1160 = vmatprep.subr.mxu0 0.0
    %1161 = vmatpush1.msra.mxu0 %v892
    %1162 = vmatprep.subr.mxu0 0.0
    %1163 = vmatpush1.msra.mxu0 %v893
    %1164 = vmatprep.subr.mxu0 0.0
    %1165 = vmatpush1.msra.mxu0 %v894
    %1166 = vmatprep.subr.mxu0 0.0
    %1167 = vmatpush1.msra.mxu0 %v895
    %1168 = vmatprep.subr.mxu0 0.0
    %1169 = vmatpush1.msra.mxu0 %v896
    %1170 = vmatprep.subr.mxu0 0.0
    %1171 = vmatpush1.msra.mxu0 %v897
    %1172 = vmatprep.mubr.f32.mxu0 %v761
    %1173 = vmatmul.mubr.f32.gmra.mrb[0].mxu0 %v760
    %v1174 = vpop.f32.mrb[0].mxu0
    %v1175 = vadd.f32 %v1105, %v1174
    %v1176 = vpop.f32.mrb[0].mxu0
    %1177 = vdwg.mxu0
    %v1178 = vrot.slane %v1175, 4
    %v1179 = vadd.f32 %v1175, %v1178
    %v1180 = vrot.slane %v1179, 2
    %v1181 = vadd.f32 %v1179, %v1180
    %v1182 = vrot.slane %v1181, 1
    %v1183 = vadd.f32 %v1181, %v1182
    %v1184 = vmul.f32 %v1183, %v463
    %v1185 = vmul.f32 %v1175, %v1175
    %v1186 = vrot.slane %v1185, 4
    %v1187 = vadd.f32 %v1185, %v1186
    %v1188 = vrot.slane %v1187, 2
    %v1189 = vadd.f32 %v1187, %v1188
    %v1190 = vrot.slane %v1189, 1
    %v1191 = vadd.f32 %v1189, %v1190
    %v1192 = vmul.f32 %v1191, %v463
    %v1193 = vmul.f32 %v1184, %v1184
    %v1194 = vsub.f32 %v1192, %v1193
    %v1195 = vmax.f32 %v1194, 0.0
    %v1196 = vsub.f32 %v1175, %v1184
    %v1197 = vadd.f32 %v1195, 1e-05
    %v1198 = vrsqrt.pop %v1197
    %v1199 = vmul.f32 %v1196, %v1198
    %v1200 = vlaneseq
    %v1201 = vshrl.u32 %v1200, 7
    %v1202 = vsub.s32 0, %v1201
    %v1203 = vrot.slane %v94, %v1202
    %v1204 = vmul.f32 %v1199, %v1203
    %v1205 = vlaneseq
    %v1206 = vshrl.u32 %v1205, 7
    %v1207 = vsub.s32 1, %v1206
    %v1208 = vrot.slane %v94, %v1207
    %v1209 = vadd.f32 %v1204, %v1208
    %v1210 = vmax.f32 %v1209, 0.0
    %1211 = vst [vmem:[#allocation12] sm:$0xff] %v1210
    %v1212 = vld [vmem:[#allocation10] sm:$0xff]
    %v1213 = vld [vmem:[#allocation10 + $0x8] sm:$0xff]
    %v1214 = vld [vmem:[#allocation10 + $0x10] sm:$0xff]
    %v1215 = vld [vmem:[#allocation10 + $0x18] sm:$0xff]
    %v1216 = vld [vmem:[#allocation10 + $0x20] sm:$0xff]
    %v1217 = vld [vmem:[#allocation10 + $0x28] sm:$0xff]
    %v1218 = vld [vmem:[#allocation10 + $0x30] sm:$0xff]
    %v1219 = vld [vmem:[#allocation10 + $0x38] sm:$0xff]
    %v1220 = vld [vmem:[#allocation10 + $0x40] sm:$0xff]
    %v1221 = vld [vmem:[#allocation10 + $0x48] sm:$0xff]
    %v1222 = vld [vmem:[#allocation10 + $0x50] sm:$0xff]
    %v1223 = vld [vmem:[#allocation10 + $0x58] sm:$0xff]
    %v1224 = vld [vmem:[#allocation10 + $0x60] sm:$0xff]
    %v1225 = vld [vmem:[#allocation10 + $0x68] sm:$0xff]
    %v1226 = vld [vmem:[#allocation10 + $0x70] sm:$0xff]
    %v1227 = vld [vmem:[#allocation10 + $0x78] sm:$0xff]
    %1228 = vmatprep.subr.mxu0 0.0
    %1229 = vmatpush1.msra.mxu0 %v1212
    %1230 = vmatprep.subr.mxu0 0.0
    %1231 = vmatpush1.msra.mxu0 %v1213
    %1232 = vmatprep.subr.mxu0 0.0
    %1233 = vmatpush1.msra.mxu0 %v1214
    %1234 = vmatprep.subr.mxu0 0.0
    %1235 = vmatpush1.msra.mxu0 %v1215
    %1236 = vmatprep.subr.mxu0 0.0
    %1237 = vmatpush1.msra.mxu0 %v1216
    %1238 = vmatprep.subr.mxu0 0.0
    %1239 = vmatpush1.msra.mxu0 %v1217
    %1240 = vmatprep.subr.mxu0 0.0
    %1241 = vmatpush1.msra.mxu0 %v1218
    %1242 = vmatprep.subr.mxu0 0.0
    %1243 = vmatpush1.msra.mxu0 %v1219
    %1244 = vmatprep.subr.mxu0 0.0
    %1245 = vmatpush1.msra.mxu0 %v1220
    %1246 = vmatprep.subr.mxu0 0.0
    %1247 = vmatpush1.msra.mxu0 %v1221
    %1248 = vmatprep.subr.mxu0 0.0
    %1249 = vmatpush1.msra.mxu0 %v1222
    %1250 = vmatprep.subr.mxu0 0.0
    %1251 = vmatpush1.msra.mxu0 %v1223
    %1252 = vmatprep.subr.mxu0 0.0
    %1253 = vmatpush1.msra.mxu0 %v1224
    %1254 = vmatprep.subr.mxu0 0.0
    %1255 = vmatpush1.msra.mxu0 %v1225
    %1256 = vmatprep.subr.mxu0 0.0
    %1257 = vmatpush1.msra.mxu0 %v1226
    %1258 = vmatprep.subr.mxu0 0.0
    %1259 = vmatpush1.msra.mxu0 %v1227
    %1260 = vmatprep.subr.mxu0 0.0
    %1261 = vmatpush1.msra.mxu0 0.0
    %1262 = vmatprep.subr.mxu0 0.0
    %1263 = vmatpush1.msra.mxu0 0.0
    %1264 = vmatprep.subr.mxu0 0.0
    %1265 = vmatpush1.msra.mxu0 0.0
    %1266 = vmatprep.subr.mxu0 0.0
    %1267 = vmatpush1.msra.mxu0 0.0
    %1268 = vmatprep.subr.mxu0 0.0
    %1269 = vmatpush1.msra.mxu0 0.0
    %1270 = vmatprep.subr.mxu0 0.0
    %1271 = vmatpush1.msra.mxu0 0.0
    %1272 = vmatprep.subr.mxu0 0.0
    %1273 = vmatpush1.msra.mxu0 0.0
    %1274 = vmatprep.subr.mxu0 0.0
    %1275 = vmatpush1.msra.mxu0 0.0
    %1276 = vmatprep.subr.mxu0 0.0
    %1277 = vmatpush1.msra.mxu0 0.0
    %1278 = vmatprep.subr.mxu0 0.0
    %1279 = vmatpush1.msra.mxu0 0.0
    %1280 = vmatprep.subr.mxu0 0.0
    %1281 = vmatpush1.msra.mxu0 0.0
    %1282 = vmatprep.subr.mxu0 0.0
    %1283 = vmatpush1.msra.mxu0 0.0
    %1284 = vmatprep.subr.mxu0 0.0
    %1285 = vmatpush1.msra.mxu0 0.0
    %1286 = vmatprep.subr.mxu0 0.0
    %1287 = vmatpush1.msra.mxu0 0.0
    %1288 = vmatprep.subr.mxu0 0.0
    %1289 = vmatpush1.msra.mxu0 0.0
    %1290 = vmatprep.subr.mxu0 0.0
    %1291 = vmatpush1.msra.mxu0 0.0
    %1292 = vmatprep.mubr.f32.mxu0 0.0
    %1293 = vmatmul.mubr.f32.gmra.mrb[0].mxu0 %v1210
    %v1294 = vpop.f32.mrb[0].mxu0
    %v1295 = vadd.f32 0.0, %v1294
    %v1296 = vpop.f32.mrb[0].mxu0
    %1297 = vdwg.mxu0
    %v1298 = vrot.slane %v1295, 4
    %v1299 = vadd.f32 %v1295, %v1298
    %v1300 = vrot.slane %v1299, 2
    %v1301 = vadd.f32 %v1299, %v1300
    %v1302 = vrot.slane %v1301, 1
    %v1303 = vadd.f32 %v1301, %v1302
    %v1304 = vmul.f32 %v1303, %v463
    %v1305 = vmul.f32 %v1295, %v1295
    %v1306 = vrot.slane %v1305, 4
    %v1307 = vadd.f32 %v1305, %v1306
    %v1308 = vrot.slane %v1307, 2
    %v1309 = vadd.f32 %v1307, %v1308
    %v1310 = vrot.slane %v1309, 1
    %v1311 = vadd.f32 %v1309, %v1310
    %v1312 = vmul.f32 %v1311, %v463
    %v1313 = vmul.f32 %v1304, %v1304
    %v1314 = vsub.f32 %v1312, %v1313
    %v1315 = vmax.f32 %v1314, 0.0
    %v1316 = vsub.f32 %v1295, %v1304
    %v1317 = vadd.f32 %v1315, 1e-05
    %v1318 = vrsqrt.pop %v1317
    %v1319 = vmul.f32 %v1316, %v1318
    %v1320 = vlaneseq
    %v1321 = vshrl.u32 %v1320, 7
    %v1322 = vsub.s32 2, %v1321
    %v1323 = vrot.slane %v94, %v1322
    %v1324 = vmul.f32 %v1319, %v1323
    %v1325 = vlaneseq
    %v1326 = vshrl.u32 %v1325, 7
    %v1327 = vsub.s32 3, %v1326
    %v1328 = vrot.slane %v94, %v1327
    %v1329 = vadd.f32 %v1324, %v1328
    %v1330 = vmax.f32 %v1329, 0.0
    %s1331 = scalar_lea.vmem [#allocation12], 8
    %1332 = vst [vmem:[%s1331] sm:$0xff] %v1330
    %s1333 = scalar_lea.vmem [#allocation10], 128
    %v1334 = vld [vmem:[%s1333] sm:$0xff]
    %v1335 = vld [vmem:[%s1333 + $0x8] sm:$0xff]
    %v1336 = vld [vmem:[%s1333 + $0x10] sm:$0xff]
    %v1337 = vld [vmem:[%s1333 + $0x18] sm:$0xff]
    %v1338 = vld [vmem:[%s1333 + $0x20] sm:$0xff]
    %v1339 = vld [vmem:[%s1333 + $0x28] sm:$0xff]
    %v1340 = vld [vmem:[%s1333 + $0x30] sm:$0xff]
    %v1341 = vld [vmem:[%s1333 + $0x38] sm:$0xff]
    %v1342 = vld [vmem:[%s1333 + $0x40] sm:$0xff]
    %v1343 = vld [vmem:[%s1333 + $0x48] sm:$0xff]
    %v1344 = vld [vmem:[%s1333 + $0x50] sm:$0xff]
    %v1345 = vld [vmem:[%s1333 + $0x58] sm:$0xff]
    %v1346 = vld [vmem:[%s1333 + $0x60] sm:$0xff]
    %v1347 = vld [vmem:[%s1333 + $0x68] sm:$0xff]
    %v1348 = vld [vmem:[%s1333 + $0x70] sm:$0xff]
    %v1349 = vld [vmem:[%s1333 + $0x78] sm:$0xff]
    %1350 = vmatprep.subr.mxu0 0.0
    %1351 = vmatpush1.msra.mxu0 %v1334
    %1352 = vmatprep.subr.mxu0 0.0
    %1353 = vmatpush1.msra.mxu0 %v1335
    %1354 = vmatprep.subr.mxu0 0.0
    %1355 = vmatpush1.msra.mxu0 %v1336
    %1356 = vmatprep.subr.mxu0 0.0
    %1357 = vmatpush1.msra.mxu0 %v1337
    %1358 = vmatprep.subr.mxu0 0.0
    %1359 = vmatpush1.msra.mxu0 %v1338
    %1360 = vmatprep.subr.mxu0 0.0
    %1361 = vmatpush1.msra.mxu0 %v1339
    %1362 = vmatprep.subr.mxu0 0.0
    %1363 = vmatpush1.msra.mxu0 %v1340
    %1364 = vmatprep.subr.mxu0 0.0
    %1365 = vmatpush1.msra.mxu0 %v1341
    %1366 = vmatprep.subr.mxu0 0.0
    %1367 = vmatpush1.msra.mxu0 %v1342
    %1368 = vmatprep.subr.mxu0 0.0
    %1369 = vmatpush1.msra.mxu0 %v1343
    %1370 = vmatprep.subr.mxu0 0.0
    %1371 = vmatpush1.msra.mxu0 %v1344
    %1372 = vmatprep.subr.mxu0 0.0
    %1373 = vmatpush1.msra.mxu0 %v1345
    %1374 = vmatprep.subr.mxu0 0.0
    %1375 = vmatpush1.msra.mxu0 %v1346
    %1376 = vmatprep.subr.mxu0 0.0
    %1377 = vmatpush1.msra.mxu0 %v1347
    %1378 = vmatprep.subr.mxu0 0.0
    %1379 = vmatpush1.msra.mxu0 %v1348
    %1380 = vmatprep.subr.mxu0 0.0
    %1381 = vmatpush1.msra.mxu0 %v1349
    %1382 = vmatprep.subr.mxu0 0.0
    %1383 = vmatpush1.msra.mxu0 0.0
    %1384 = vmatprep.subr.mxu0 0.0
    %1385 = vmatpush1.msra.mxu0 0.0
    %1386 = vmatprep.subr.mxu0 0.0
    %1387 = vmatpush1.msra.mxu0 0.0
    %1388 = vmatprep.subr.mxu0 0.0
    %1389 = vmatpush1.msra.mxu0 0.0
    %1390 = vmatprep.subr.mxu0 0.0
    %1391 = vmatpush1.msra.mxu0 0.0
    %1392 = vmatprep.subr.mxu0 0.0
    %1393 = vmatpush1.msra.mxu0 0.0
    %1394 = vmatprep.subr.mxu0 0.0
    %1395 = vmatpush1.msra.mxu0 0.0
    %1396 = vmatprep.subr.mxu0 0.0
    %1397 = vmatpush1.msra.mxu0 0.0
    %1398 = vmatprep.subr.mxu0 0.0
    %1399 = vmatpush1.msra.mxu0 0.0
    %1400 = vmatprep.subr.mxu0 0.0
    %1401 = vmatpush1.msra.mxu0 0.0
    %1402 = vmatprep.subr.mxu0 0.0
    %1403 = vmatpush1.msra.mxu0 0.0
    %1404 = vmatprep.subr.mxu0 0.0
    %1405 = vmatpush1.msra.mxu0 0.0
    %1406 = vmatprep.subr.mxu0 0.0
    %1407 = vmatpush1.msra.mxu0 0.0
    %1408 = vmatprep.subr.mxu0 0.0
    %1409 = vmatpush1.msra.mxu0 0.0
    %1410 = vmatprep.subr.mxu0 0.0
    %1411 = vmatpush1.msra.mxu0 0.0
    %1412 = vmatprep.subr.mxu0 0.0
    %1413 = vmatpush1.msra.mxu0 0.0
    %1414 = vmatprep.mubr.f32.mxu0 0.0
    %1415 = vmatmul.mubr.f32.gmra.mrb[0].mxu0 %v1330
    %v1416 = vpop.f32.mrb[0].mxu0
    %v1417 = vadd.f32 0.0, %v1416
    %v1418 = vpop.f32.mrb[0].mxu0
    %1419 = vdwg.mxu0
    %v1420 = vrot.slane %v1417, 4
    %v1421 = vadd.f32 %v1417, %v1420
    %v1422 = vrot.slane %v1421, 2
    %v1423 = vadd.f32 %v1421, %v1422
    %v1424 = vrot.slane %v1423, 1
    %v1425 = vadd.f32 %v1423, %v1424
    %v1426 = vmul.f32 %v1425, %v463
    %v1427 = vmul.f32 %v1417, %v1417
    %v1428 = vrot.slane %v1427, 4
    %v1429 = vadd.f32 %v1427, %v1428
    %v1430 = vrot.slane %v1429, 2
    %v1431 = vadd.f32 %v1429, %v1430
    %v1432 = vrot.slane %v1431, 1
    %v1433 = vadd.f32 %v1431, %v1432
    %v1434 = vmul.f32 %v1433, %v463
    %v1435 = vmul.f32 %v1426, %v1426
    %v1436 = vsub.f32 %v1434, %v1435
    %v1437 = vmax.f32 %v1436, 0.0
    %v1438 = vsub.f32 %v1417, %v1426
    %v1439 = vadd.f32 %v1437, 1e-05
    %v1440 = vrsqrt.pop %v1439
    %v1441 = vmul.f32 %v1438, %v1440
    %v1442 = vlaneseq
    %v1443 = vshrl.u32 %v1442, 7
    %v1444 = vsub.s32 4, %v1443
    %v1445 = vrot.slane %v94, %v1444
    %v1446 = vmul.f32 %v1441, %v1445
    %v1447 = vlaneseq
    %v1448 = vshrl.u32 %v1447, 7
    %v1449 = vsub.s32 5, %v1448
    %v1450 = vrot.slane %v94, %v1449
    %v1451 = vadd.f32 %v1446, %v1450
    %v1452 = vmax.f32 %v1451, 0.0
    %s1453 = scalar_lea.vmem [#allocation12], 16
    %1454 = vst [vmem:[%s1453] sm:$0xff] %v1452
    %s1455 = scalar_lea.vmem [#allocation10], 256
    %v1456 = vld [vmem:[%s1455] sm:$0xff]
    %v1457 = vld [vmem:[%s1455 + $0x8] sm:$0xff]
    %v1458 = vld [vmem:[%s1455 + $0x10] sm:$0xff]
    %v1459 = vld [vmem:[%s1455 + $0x18] sm:$0xff]
    %v1460 = vld [vmem:[%s1455 + $0x20] sm:$0xff]
    %v1461 = vld [vmem:[%s1455 + $0x28] sm:$0xff]
    %v1462 = vld [vmem:[%s1455 + $0x30] sm:$0xff]
    %v1463 = vld [vmem:[%s1455 + $0x38] sm:$0xff]
    %v1464 = vld [vmem:[%s1455 + $0x40] sm:$0xff]
    %v1465 = vld [vmem:[%s1455 + $0x48] sm:$0xff]
    %v1466 = vld [vmem:[%s1455 + $0x50] sm:$0xff]
    %v1467 = vld [vmem:[%s1455 + $0x58] sm:$0xff]
    %v1468 = vld [vmem:[%s1455 + $0x60] sm:$0xff]
    %v1469 = vld [vmem:[%s1455 + $0x68] sm:$0xff]
    %v1470 = vld [vmem:[%s1455 + $0x70] sm:$0xff]
    %v1471 = vld [vmem:[%s1455 + $0x78] sm:$0xff]
    %v1472 = vlaneseq
    %v1473 = vshrl.u32 %v1472, 7
    %v1474 = vsub.s32 6, %v1473
    %v1475 = vrot.slane %v94, %v1474
    %1476 = vmatprep.subr.mxu0 0.0
    %1477 = vmatpush1.msra.mxu0 %v1456
    %1478 = vmatprep.subr.mxu0 0.0
    %1479 = vmatpush1.msra.mxu0 %v1457
    %1480 = vmatprep.subr.mxu0 0.0
    %1481 = vmatpush1.msra.mxu0 %v1458
    %1482 = vmatprep.subr.mxu0 0.0
    %1483 = vmatpush1.msra.mxu0 %v1459
    %1484 = vmatprep.subr.mxu0 0.0
    %1485 = vmatpush1.msra.mxu0 %v1460
    %1486 = vmatprep.subr.mxu0 0.0
    %1487 = vmatpush1.msra.mxu0 %v1461
    %1488 = vmatprep.subr.mxu0 0.0
    %1489 = vmatpush1.msra.mxu0 %v1462
    %1490 = vmatprep.subr.mxu0 0.0
    %1491 = vmatpush1.msra.mxu0 %v1463
    %1492 = vmatprep.subr.mxu0 0.0
    %1493 = vmatpush1.msra.mxu0 %v1464
    %1494 = vmatprep.subr.mxu0 0.0
    %1495 = vmatpush1.msra.mxu0 %v1465
    %1496 = vmatprep.subr.mxu0 0.0
    %1497 = vmatpush1.msra.mxu0 %v1466
    %1498 = vmatprep.subr.mxu0 0.0
    %1499 = vmatpush1.msra.mxu0 %v1467
    %1500 = vmatprep.subr.mxu0 0.0
    %1501 = vmatpush1.msra.mxu0 %v1468
    %1502 = vmatprep.subr.mxu0 0.0
    %1503 = vmatpush1.msra.mxu0 %v1469
    %1504 = vmatprep.subr.mxu0 0.0
    %1505 = vmatpush1.msra.mxu0 %v1470
    %1506 = vmatprep.subr.mxu0 0.0
    %1507 = vmatpush1.msra.mxu0 %v1471
    %1508 = vmatprep.subr.mxu0 0.0
    %1509 = vmatpush1.msra.mxu0 0.0
    %1510 = vmatprep.subr.mxu0 0.0
    %1511 = vmatpush1.msra.mxu0 0.0
    %1512 = vmatprep.subr.mxu0 0.0
    %1513 = vmatpush1.msra.mxu0 0.0
    %1514 = vmatprep.subr.mxu0 0.0
    %1515 = vmatpush1.msra.mxu0 0.0
    %1516 = vmatprep.subr.mxu0 0.0
    %1517 = vmatpush1.msra.mxu0 0.0
    %1518 = vmatprep.subr.mxu0 0.0
    %1519 = vmatpush1.msra.mxu0 0.0
    %1520 = vmatprep.subr.mxu0 0.0
    %1521 = vmatpush1.msra.mxu0 0.0
    %1522 = vmatprep.subr.mxu0 0.0
    %1523 = vmatpush1.msra.mxu0 0.0
    %1524 = vmatprep.subr.mxu0 0.0
    %1525 = vmatpush1.msra.mxu0 0.0
    %1526 = vmatprep.subr.mxu0 0.0
    %1527 = vmatpush1.msra.mxu0 0.0
    %1528 = vmatprep.subr.mxu0 0.0
    %1529 = vmatpush1.msra.mxu0 0.0
    %1530 = vmatprep.subr.mxu0 0.0
    %1531 = vmatpush1.msra.mxu0 0.0
    %1532 = vmatprep.subr.mxu0 0.0
    %1533 = vmatpush1.msra.mxu0 0.0
    %1534 = vmatprep.subr.mxu0 0.0
    %1535 = vmatpush1.msra.mxu0 0.0
    %1536 = vmatprep.subr.mxu0 0.0
    %1537 = vmatpush1.msra.mxu0 0.0
    %1538 = vmatprep.subr.mxu0 0.0
    %1539 = vmatpush1.msra.mxu0 0.0
    %1540 = vmatprep.mubr.f32.mxu0 0.0
    %1541 = vmatmul.mubr.f32.gmra.mrb[0].mxu0 %v1452
    %v1542 = vpop.f32.mrb[0].mxu0
    %v1543 = vadd.f32 %v1475, %v1542
    %v1544 = vpop.f32.mrb[0].mxu0
    %1545 = vdwg.mxu0
    %s1546 = scalar_lea.vmem [#allocation12], 24
    %1547 = vst [vmem:[%s1546] sm:$0xff] %v1543
    %1548 = vmax.xlane.f32.xlu0 %v1543
    %v1549 = vpop.xlane.xlu0 %1548
    %v1550 = vsub.f32 %v1543, %v1549
    %v1551 = vmul.f32 %v1550, 1.442695
    %v1552 = vpow.pop %v1551
    %1553 = vadd.xlane.f32.xlu0 %v1552
    %v1554 = vpop.xlane.xlu0 %1553
    %v1555 = vrcp.pop %v1554
    %v1556 = vmul.f32 %v1552, %v1555
    %s1557 = scalar_lea.vmem [#allocation12], 32
    %1558 = vst [vmem:[%s1557] sm:$0xff] %v1556
    // Predicated region
    $region46: #{tpu_custom_call.1} parent=1 // pred_check
      _
    $region47: #{tpu_custom_call.1} parent=1 // pred_check_branch
      %1560 = sbr.rel (0) target = $region49
    $region48: #{tpu_custom_call.1} parent=1 // pred_region
      %s1562 = ssub.s32 1024, 1024
      %1563 = vsyncadd [#allocation4], %s1562
      %s1565 = sshll.u32 [#allocation11], 4
      %s1566 = int_to_ptr.vmem [resolvable:$true] %s1565
      %1568 = dma.vmem_to_hbm [thread:$0]  %s1566, 1024, %s6, [#allocation4]
    $region49: #{tpu_custom_call.1} parent=1 // pred_fallthru
      _
    // Predicated region
    $region50: #{tpu_custom_call.1} parent=1 // pred_check
      _
    $region51: #{tpu_custom_call.1} parent=1 // pred_check_branch
      %1570 = sbr.rel (0) target = $region53
    $region52: #{tpu_custom_call.1} parent=1 // pred_region
      %s1572 = ssub.s32 640, 640
      %1573 = vsyncadd [#allocation13], %s1572
      %s1574 = sshll.u32 [#allocation12], 4
      %s1575 = int_to_ptr.vmem [resolvable:$true] %s1574
      %1580 = dma.vmem_to_hbm [thread:$0]  %s1575, 640, %s7, [#allocation13], 128, 128, 8
    $region53: #{tpu_custom_call.1} parent=1 // pred_fallthru
      _
    // Predicated region
    $region54: #{tpu_custom_call.1} parent=1 // pred_check
      _
    $region55: #{tpu_custom_call.1} parent=1 // pred_check_branch
      %1582 = sbr.rel (0) target = $region57
    $region56: #{tpu_custom_call.1} parent=1 // pred_region
      %1583 = dma.done [#allocation4], 1024
    $region57: #{tpu_custom_call.1} parent=1 // pred_fallthru
      _
    // Predicated region
    $region58: #{tpu_custom_call.1} parent=1 // pred_check
      _
    $region59: #{tpu_custom_call.1} parent=1 // pred_check_branch
      %1585 = sbr.rel (0) target = $region61
    $region60: #{tpu_custom_call.1} parent=1 // pred_region
      %1586 = dma.done [#allocation13], 640
    $region61: #{tpu_custom_call.1} parent=1 // pred_fallthru
      _
    %1587 = vsyncpa [#allocation3], 1
    %1588 = vsyncpa [#allocation6], 1
    %1589 = vsyncpa [#allocation9], 1
    %1590 = vsyncpa [#allocation4], 1
    %1591 = vsyncpa [#allocation13], 1

</llo_original>
